<compile_context>
chip_gen: v7x
topology: tpu7x:2x2x1
jax: 0.10.0
libtpu: 0.0.40
codegen_flags: <defaults>
</compile_context>

<pallas_src>
import math
import functools

import jax
import jax.numpy as jnp
from jax.experimental import pallas as pl
from jax.experimental.pallas import tpu as pltpu


# Set False for accuracy-sensitive evals: exact f32 divide in the softmax
# denominator instead of the EUP approximate reciprocal.
SOFTMAX_APPROX_RECIP = True


# ---------------------------------------------------------------------------
# In-kernel helpers (f32)
# ---------------------------------------------------------------------------
def _layer_norm(x, gamma, beta, eps=1e-5):
    mu = jnp.mean(x, axis=-1, keepdims=True)
    var = jnp.mean((x - mu) ** 2, axis=-1, keepdims=True)
    return (x - mu) * jax.lax.rsqrt(var + eps) * gamma + beta


def _quick_gelu(x):
    return x * jax.nn.sigmoid(1.702 * x)


def _softmax_lastdim(s, approx_recip):
    s = s - jnp.max(s, axis=-1, keepdims=True)
    p = jnp.exp(s)
    denom = jnp.sum(p, axis=-1, keepdims=True)
    if approx_recip:
        return p * pl.reciprocal(denom, approx=True)   # EUP vrcp slot
    return p / denom


# ---------------------------------------------------------------------------
# Fused kernel: one grid step = one ResidualAttentionBlock applied to one
# batch element.  Grid = (B, L); the residual stream is kept in o_ref
# (VMEM-resident across the L axis).  Weight refs are per-layer (1, ...)
# blocks of the stacked (L, ...) arrays, double-buffered by the pipeliner.
#
# Weights are pre-transposed (row-major (K, N)) bf16; the softmax scale is
# already folded into the Q columns of wqkv / bqkv.
# ---------------------------------------------------------------------------
def fused_resblock_kernel(
    x_ref, ln1_g_ref, ln1_b_ref, wqkv_ref, bqkv_ref, wout_ref, bout_ref,
    ln2_g_ref, ln2_b_ref, wfc_ref, bfc_ref, wproj_ref, bproj_ref, o_ref,
    *, n_head: int, approx_recip: bool,
):
    l = pl.program_id(1)

    # Initialize the resident residual stream from the input on layer 0.
    @pl.when(l == 0)
    def _():
        o_ref[...] = x_ref[...]

    x = o_ref[0].astype(jnp.float32)               # (S, D) residual stream
    S, D = x.shape
    hd = D // n_head
    cdt = wqkv_ref.dtype                           # MXU input dtype (bf16)

    # ---- attention branch: x + out_proj(softmax(q k^T) v) ------------------
    h = _layer_norm(x, ln1_g_ref[0], ln1_b_ref[0])
    qkv = jnp.dot(h.astype(cdt), wqkv_ref[0],
                  preferred_element_type=jnp.float32)
    qkv = qkv + bqkv_ref[0]                        # (S, 3D) f32, Q pre-scaled

    # bf16 BEFORE the relayouts (half the bytes through the XLU).
    q = jnp.transpose(
        qkv[:, 0 * D:1 * D].astype(cdt).reshape(S, n_head, hd), (1, 0, 2))
    # K directly in (H, hd, S) so the scores dot is a canonical batched
    # (S,hd)x(hd,S) matmul (no per-head transpose on the MXU feed path).
    k = jnp.transpose(
        qkv[:, 1 * D:2 * D].astype(cdt).reshape(S, n_head, hd), (1, 2, 0))
    v = jnp.transpose(
        qkv[:, 2 * D:3 * D].astype(cdt).reshape(S, n_head, hd), (1, 0, 2))

    # scores (H, S, S): single batched contraction over heads.
    s = jax.lax.dot_general(q, k, (((2,), (1,)), ((0,), (0,))),
                            preferred_element_type=jnp.float32)
    p = _softmax_lastdim(s, approx_recip)

    # context (H, S, hd): batched P @ V.
    ctx = jax.lax.dot_general(p.astype(cdt), v, (((2,), (1,)), ((0,), (0,))),
                              preferred_element_type=jnp.float32)
    # bf16 before the relayout back to (S, D); feeds a bf16 matmul anyway.
    attn = jnp.transpose(ctx.astype(cdt), (1, 0, 2)).reshape(S, D)

    attn = jnp.dot(attn, wout_ref[0],
                   preferred_element_type=jnp.float32) + bout_ref[0]
    x = x + attn

    # ---- MLP branch: x + c_proj(QuickGELU(c_fc(LN2(x)))) -------------------
    h2 = _layer_norm(x, ln2_g_ref[0], ln2_b_ref[0])
    fc = jnp.dot(h2.astype(cdt), wfc_ref[0],
                 preferred_element_type=jnp.float32) + bfc_ref[0]
    fc = _quick_gelu(fc)
    proj = jnp.dot(fc.astype(cdt), wproj_ref[0],
                   preferred_element_type=jnp.float32) + bproj_ref[0]

    # NOTE(v5e): for real CLIP widths D is a multiple of 128 so this store is
    # an unmasked full vst; the toy D=32 test uses the full-array lane dim.
    o_ref[0] = (x + proj).astype(o_ref.dtype)


# ---------------------------------------------------------------------------
# VMEM budget (generation-aware) and cost estimate
# ---------------------------------------------------------------------------
def _vmem_capacity_bytes():
    try:
        return int(pltpu.get_tpu_info().vmem_capacity_bytes)
    except Exception:
        return 64 * 2 ** 20      # conservative: smallest per-core VMEM (v7x)


def _vmem_limit_bytes(S, D, n_head, per_layer_weight_bytes):
    f32 = 4
    act = (3 * S * D                  # qkv f32
           + 2 * n_head * S * S       # scores + probs f32
           + 2 * S * 4 * D            # fc pre/post GELU f32
           + 6 * S * D) * f32         # LN temps / residual / attn-out f32
    act += 4 * S * D                  # bf16 q/k/v + ctx
    io = 2 * 2 * S * D * f32          # x-in + out blocks, double-buffered
    est = 2 * per_layer_weight_bytes + act + io   # weights double-buffered
    est = int(est * 1.5)              # compiler scratch / relayout headroom
    cap = int(0.9 * _vmem_capacity_bytes())       # leave Mosaic headroom
    return max(min(est, cap), min(32 * 2 ** 20, cap))


def _cost_estimate(B, S, D, n_head, L, total_weight_bytes):
    flops = 2 * B * L * S * (12 * D * D + 2 * S * D)
    transcendentals = B * L * (n_head * S * S + 4 * S * D)
    bytes_accessed = B * total_weight_bytes + 2 * B * S * D * 4
    return pl.CostEstimate(flops=flops, transcendentals=transcendentals,
                           bytes_accessed=bytes_accessed)


# ---------------------------------------------------------------------------
# One-time parameter preparation (call ONCE per model, outside the hot path):
#   * weights pre-transposed to row-major (K, N) and cast to bf16
#   * softmax 1/sqrt(head_dim) folded into the Q columns of wqkv / bqkv
#   * all per-layer operands stacked along a leading L axis
# ---------------------------------------------------------------------------
def _prepare_layer_operands(p, n_head):
    D = p["wqkv_t"].shape[0]
    hd = D // n_head
    scale = 1.0 / math.sqrt(hd)
    wqkv = p["wqkv_t"].astype(jnp.float32).at[:, :D].multiply(scale)
    bqkv = p["bqkv"].astype(jnp.float32).at[:, :D].multiply(scale)
    return (
        p["ln1_g"].astype(jnp.float32), p["ln1_b"].astype(jnp.float32),
        wqkv.astype(jnp.bfloat16), bqkv,
        p["wout_t"].astype(jnp.bfloat16), p["bout"].astype(jnp.float32),
        p["ln2_g"].astype(jnp.float32), p["ln2_b"].astype(jnp.float32),
        p["wfc_t"].astype(jnp.bfloat16), p["bfc"].astype(jnp.float32),
        p["wproj_t"].astype(jnp.bfloat16), p["bproj"].astype(jnp.float32),
    )


def prepare_transformer_operands(layer_params, n_head):
    per_layer = [_prepare_layer_operands(p, n_head) for p in layer_params]
    n_ops = len(per_layer[0])
    stacked = tuple(
        jax.block_until_ready(jnp.stack([ops[i] for ops in per_layer], axis=0))
        for i in range(n_ops))
    return stacked


# ---------------------------------------------------------------------------
# Forward: one fused pallas_call over grid=(B, L)
# ---------------------------------------------------------------------------
def transformer_forward(x, stacked_ops, n_head, attn_mask=None):
    """Equivalent of Transformer.forward: returns (x, attn_mask).

    `stacked_ops` must come from `prepare_transformer_operands` (prepare once
    per model, NOT per forward call).
    """
    if attn_mask is not None:
        # TODO(synk): key_padding_mask / additive attn_mask not implemented.
        raise NotImplementedError("attn_mask is not supported")

    B, S, D = x.shape
    L = stacked_ops[2].shape[0]                       # wqkv stacked (L, D, 3D)
    per_layer_weight_bytes = sum(
        (int(a.size) // L) * a.dtype.itemsize for a in stacked_ops)

    x_idx = lambda b, l: (b, 0, 0)                    # constant over L -> resident
    w_idx = lambda b, l: (l, 0, 0)                    # varies over L -> prefetched

    in_specs = [pl.BlockSpec((1, S, D), x_idx)] + [
        pl.BlockSpec((1,) + a.shape[1:], w_idx) for a in stacked_ops]

    out = pl.pallas_call(
        functools.partial(fused_resblock_kernel, n_head=n_head,
                          approx_recip=SOFTMAX_APPROX_RECIP),
        out_shape=jax.ShapeDtypeStruct((B, S, D), x.dtype),
        grid_spec=pltpu.PrefetchScalarGridSpec(
            num_scalar_prefetch=0,
            grid=(B, L),
            in_specs=in_specs,
            out_specs=pl.BlockSpec((1, S, D), x_idx),
        ),
        compiler_params=pltpu.CompilerParams(
            dimension_semantics=("parallel", "arbitrary"),
            vmem_limit_bytes=_vmem_limit_bytes(S, D, n_head,
                                               per_layer_weight_bytes),
        ),
        cost_estimate=_cost_estimate(B, S, D, n_head, L,
                                     per_layer_weight_bytes * L),
    )(x, *stacked_ops)
    return out, attn_mask


# ---------------------------------------------------------------------------
# Deterministic parameter construction (mirrors nn.Module shapes)
# ---------------------------------------------------------------------------
def init_transformer_params(key, width, layers):
    d = width
    layer_params = []
    for _ in range(layers):
        keys = jax.random.split(key, 8)
        key = keys[0]
        wqkv = 0.02 * jax.random.normal(keys[1], (3 * d, d), jnp.float32)
        bqkv = 0.02 * jax.random.normal(keys[2], (3 * d,), jnp.float32)
        wout = 0.02 * jax.random.normal(keys[3], (d, d), jnp.float32)
        bout = jnp.zeros((d,), jnp.float32)
        wfc = 0.02 * jax.random.normal(keys[4], (4 * d, d), jnp.float32)
        bfc = 0.02 * jax.random.normal(keys[5], (4 * d,), jnp.float32)
        wproj = 0.02 * jax.random.normal(keys[6], (d, 4 * d), jnp.float32)
        bproj = jnp.zeros((d,), jnp.float32)
        layer_params.append(dict(
            ln1_g=jnp.ones((1, d), jnp.float32),
            ln1_b=jnp.zeros((1, d), jnp.float32),
            wqkv_t=wqkv.T,                 # (d, 3d)
            bqkv=bqkv.reshape(1, 3 * d),
            wout_t=wout.T,                 # (d, d)
            bout=bout.reshape(1, d),
            ln2_g=jnp.ones((1, d), jnp.float32),
            ln2_b=jnp.zeros((1, d), jnp.float32),
            wfc_t=wfc.T,                   # (d, 4d)
            bfc=bfc.reshape(1, 4 * d),
            wproj_t=wproj.T,               # (4d, d)
            bproj=bproj.reshape(1, d),
        ))
    return layer_params


# ---------------------------------------------------------------------------
# Pure-JAX f32 reference (mirrors PyTorch semantics)
# ---------------------------------------------------------------------------
def _ref_block(x, p, n_head):
    d = x.shape[-1]
    hd = d // n_head

    def ln(t, g, b):
        mu = t.mean(-1, keepdims=True)
        var = ((t - mu) ** 2).mean(-1, keepdims=True)
        return (t - mu) / jnp.sqrt(var + 1e-5) * g + b

    h = ln(x, p["ln1_g"][0], p["ln1_b"][0])
    qkv = h @ p["wqkv_t"] + p["bqkv"][0]
    q, k, v = jnp.split(qkv, 3, axis=-1)
    B, S, _ = x.shape
    q = q.reshape(B, S, n_head, hd).transpose(0, 2, 1, 3)
    k = k.reshape(B, S, n_head, hd).transpose(0, 2, 1, 3)
    v = v.reshape(B, S, n_head, hd).transpose(0, 2, 1, 3)
    s = jnp.einsum("bhqd,bhkd->bhqk", q, k) / math.sqrt(hd)
    pw = jax.nn.softmax(s, axis=-1)
    o = jnp.einsum("bhqk,bhkd->bhqd", pw, v).transpose(0, 2, 1, 3).reshape(B, S, d)
    o = o @ p["wout_t"] + p["bout"][0]
    x = x + o
    h2 = ln(x, p["ln2_g"][0], p["ln2_b"][0])
    fc = h2 @ p["wfc_t"] + p["bfc"][0]
    fc = fc * jax.nn.sigmoid(1.702 * fc)
    return x + fc @ p["wproj_t"] + p["bproj"][0]


def _ref_transformer(x, layer_params, n_head):
    for p in layer_params:
        x = _ref_block(x, p, n_head)
    return x


# ---------------------------------------------------------------------------
if __name__ == "__main__":
    # Transformer(width=32, layers=2, heads=4); x: (batch=2, seq=8, width=32)
    WIDTH, LAYERS, HEADS = 32, 2, 4
    B, S = 2, 8

    key = jax.random.PRNGKey(0)
    kx, kp = jax.random.split(key)
    x = jax.random.normal(kx, (B, S, WIDTH), jnp.float32)
    layer_params = init_transformer_params(kp, WIDTH, LAYERS)

    # One-time operand prep (bf16 cast, scale folding, layer stacking).
    stacked_ops = prepare_transformer_operands(layer_params, HEADS)

    out, mask_out = transformer_forward(x, stacked_ops, HEADS, attn_mask=None)
    out = jax.block_until_ready(out)

    ref = _ref_transformer(x, layer_params, HEADS)
    assert out.shape == (B, S, WIDTH)
    assert mask_out is None
    # bf16 matmuls + approx softmax reciprocal -> loosened tolerance vs f32 ref
    max_err = float(jnp.max(jnp.abs(out - ref)))
    assert jnp.allclose(out, ref, atol=1e-2, rtol=1e-2), (
        f"mismatch vs JAX reference, max abs err {max_err}")

    print("KERNEL_OK")
</pallas_src>

<mosaic_0001>
module attributes {stable_mosaic.version = 11 : i64} {
  func.func @fused_resblock_kernel(%arg0: i32, %arg1: i32, %arg2: memref<1x8x32xf32, #tpu.memory_space<vmem>>, %arg3: memref<1x1x32xf32, #tpu.memory_space<vmem>>, %arg4: memref<1x1x32xf32, #tpu.memory_space<vmem>>, %arg5: memref<1x32x96xbf16, #tpu.memory_space<vmem>>, %arg6: memref<1x1x96xf32, #tpu.memory_space<vmem>>, %arg7: memref<1x32x32xbf16, #tpu.memory_space<vmem>>, %arg8: memref<1x1x32xf32, #tpu.memory_space<vmem>>, %arg9: memref<1x1x32xf32, #tpu.memory_space<vmem>>, %arg10: memref<1x1x32xf32, #tpu.memory_space<vmem>>, %arg11: memref<1x32x128xbf16, #tpu.memory_space<vmem>>, %arg12: memref<1x1x128xf32, #tpu.memory_space<vmem>>, %arg13: memref<1x128x32xbf16, #tpu.memory_space<vmem>>, %arg14: memref<1x1x32xf32, #tpu.memory_space<vmem>>, %arg15: memref<1x8x32xf32, #tpu.memory_space<vmem>>) attributes {dimension_semantics = [#tpu.dimension_semantics<parallel>, #tpu.dimension_semantics<arbitrary>], iteration_bounds = array<i64: 2, 2>, scalar_prefetch = 0 : i64, scratch_operands = 0 : i64, tpu.core_type = #tpu.core_type<tc>, window_params = [{transform_indices = @transform_0, window_bounds = array<i64: 1, 8, 32>}, {transform_indices = @transform_1, window_bounds = array<i64: 1, 1, 32>}, {transform_indices = @transform_2, window_bounds = array<i64: 1, 1, 32>}, {transform_indices = @transform_3, window_bounds = array<i64: 1, 32, 96>}, {transform_indices = @transform_4, window_bounds = array<i64: 1, 1, 96>}, {transform_indices = @transform_5, window_bounds = array<i64: 1, 32, 32>}, {transform_indices = @transform_6, window_bounds = array<i64: 1, 1, 32>}, {transform_indices = @transform_7, window_bounds = array<i64: 1, 1, 32>}, {transform_indices = @transform_8, window_bounds = array<i64: 1, 1, 32>}, {transform_indices = @transform_9, window_bounds = array<i64: 1, 32, 128>}, {transform_indices = @transform_10, window_bounds = array<i64: 1, 1, 128>}, {transform_indices = @transform_11, window_bounds = array<i64: 1, 128, 32>}, {transform_indices = @transform_12, window_bounds = array<i64: 1, 1, 32>}, {transform_indices = @transform_13, window_bounds = array<i64: 1, 8, 32>}]} {
    %c0_i32 = arith.constant 0 : i32
    %0 = arith.cmpi eq, %arg1, %c0_i32 : i32
    %1 = arith.extui %0 : i1 to i32
    %c0_i32_0 = arith.constant 0 : i32
    %2 = arith.cmpi ne, %1, %c0_i32_0 : i32
    scf.if %2 {
      %c0_61 = arith.constant 0 : index
      %c0_62 = arith.constant 0 : index
      %c0_63 = arith.constant 0 : index
      %129 = vector.load %arg2[%c0_61, %c0_62, %c0_63] : memref<1x8x32xf32, #tpu.memory_space<vmem>>, vector<1x8x32xf32>
      %c0_64 = arith.constant 0 : index
      %c0_65 = arith.constant 0 : index
      %c0_66 = arith.constant 0 : index
      %130 = vector.load %arg15[%c0_64, %c0_65, %c0_66] : memref<1x8x32xf32, #tpu.memory_space<vmem>>, vector<1x8x32xf32>
      tpu.vector_store %arg15[%c0_64, %c0_65, %c0_66], %129 {strides = array<i32>} : memref<1x8x32xf32, #tpu.memory_space<vmem>>, vector<1x8x32xf32>,
    } else {
    }
    %c0 = arith.constant 0 : index
    %c0_1 = arith.constant 0 : index
    %c0_2 = arith.constant 0 : index
    %3 = vector.load %arg15[%c0, %c0_1, %c0_2] : memref<1x8x32xf32, #tpu.memory_space<vmem>>, vector<1x8x32xf32>
    %4 = vector.shape_cast %3 : vector<1x8x32xf32> to vector<8x32xf32>
    %c0_3 = arith.constant 0 : index
    %c0_4 = arith.constant 0 : index
    %c0_5 = arith.constant 0 : index
    %5 = vector.load %arg3[%c0_3, %c0_4, %c0_5] : memref<1x1x32xf32, #tpu.memory_space<vmem>>, vector<1x1x32xf32>
    %6 = vector.shape_cast %5 : vector<1x1x32xf32> to vector<1x32xf32>
    %c0_6 = arith.constant 0 : index
    %c0_7 = arith.constant 0 : index
    %c0_8 = arith.constant 0 : index
    %7 = vector.load %arg4[%c0_6, %c0_7, %c0_8] : memref<1x1x32xf32, #tpu.memory_space<vmem>>, vector<1x1x32xf32>
    %8 = vector.shape_cast %7 : vector<1x1x32xf32> to vector<1x32xf32>
    %cst = arith.constant dense<0.000000e+00> : vector<8xf32>
    %9 = vector.multi_reduction <add>, %4, %cst [1] : vector<8x32xf32> to vector<8xf32>
    %10 = vector.shape_cast %9 : vector<8xf32> to vector<8x1xf32>
    %cst_9 = arith.constant 3.200000e+01 : f32
    %11 = vector.broadcast %cst_9 : f32 to vector<8x1xf32>
    %12 = arith.divf %10, %11 : vector<8x1xf32>
    %13 = vector.broadcast %12 : vector<8x1xf32> to vector<8x32xf32>
    %14 = arith.subf %4, %13 : vector<8x32xf32>
    %15 = arith.mulf %14, %14 : vector<8x32xf32>
    %cst_10 = arith.constant dense<0.000000e+00> : vector<8xf32>
    %16 = vector.multi_reduction <add>, %15, %cst_10 [1] : vector<8x32xf32> to vector<8xf32>
    %17 = vector.shape_cast %16 : vector<8xf32> to vector<8x1xf32>
    %cst_11 = arith.constant 3.200000e+01 : f32
    %18 = vector.broadcast %cst_11 : f32 to vector<8x1xf32>
    %19 = arith.divf %17, %18 : vector<8x1xf32>
    %20 = vector.broadcast %12 : vector<8x1xf32> to vector<8x32xf32>
    %21 = arith.subf %4, %20 : vector<8x32xf32>
    %cst_12 = arith.constant 9.99999974E-6 : f32
    %22 = vector.broadcast %cst_12 : f32 to vector<8x1xf32>
    %23 = arith.addf %19, %22 : vector<8x1xf32>
    %24 = math.rsqrt %23 : vector<8x1xf32>
    %25 = vector.broadcast %24 : vector<8x1xf32> to vector<8x32xf32>
    %26 = arith.mulf %21, %25 : vector<8x32xf32>
    %27 = vector.broadcast %6 : vector<1x32xf32> to vector<8x32xf32>
    %28 = arith.mulf %26, %27 : vector<8x32xf32>
    %29 = vector.broadcast %8 : vector<1x32xf32> to vector<8x32xf32>
    %30 = arith.addf %28, %29 : vector<8x32xf32>
    %31 = arith.truncf %30 : vector<8x32xf32> to vector<8x32xbf16>
    %c0_13 = arith.constant 0 : index
    %c0_14 = arith.constant 0 : index
    %c0_15 = arith.constant 0 : index
    %32 = vector.load %arg5[%c0_13, %c0_14, %c0_15] : memref<1x32x96xbf16, #tpu.memory_space<vmem>>, vector<1x32x96xbf16>
    %33 = vector.shape_cast %32 : vector<1x32x96xbf16> to vector<32x96xbf16>
    %cst_16 = arith.constant dense<0.000000e+00> : vector<8x96xf32>
    %34 = tpu.matmul %31, %33, %cst_16 {dimension_numbers = #tpu.dot_dimension_numbers<[1], [0], [0], [1], [0, 0, 1, 1], [], []>} : vector<8x32xbf16>, vector<32x96xbf16>, vector<8x96xf32> -> vector<8x96xf32>
    %c0_17 = arith.constant 0 : index
    %c0_18 = arith.constant 0 : index
    %c0_19 = arith.constant 0 : index
    %35 = vector.load %arg6[%c0_17, %c0_18, %c0_19] : memref<1x1x96xf32, #tpu.memory_space<vmem>>, vector<1x1x96xf32>
    %36 = vector.shape_cast %35 : vector<1x1x96xf32> to vector<1x96xf32>
    %37 = vector.broadcast %36 : vector<1x96xf32> to vector<8x96xf32>
    %38 = arith.addf %34, %37 : vector<8x96xf32>
    %39 = vector.extract_strided_slice %38 {offsets = [0, 0], sizes = [8, 32], strides = [1, 1]} : vector<8x96xf32> to vector<8x32xf32>
    %40 = arith.truncf %39 : vector<8x32xf32> to vector<8x32xbf16>
    %41 = vector.shape_cast %40 : vector<8x32xbf16> to vector<8x4x8xbf16>
    %42 = tpu.transpose %41, [1, 0, 2] : vector<8x4x8xbf16> -> vector<4x8x8xbf16>
    %43 = vector.extract_strided_slice %38 {offsets = [0, 32], sizes = [8, 32], strides = [1, 1]} : vector<8x96xf32> to vector<8x32xf32>
    %44 = arith.truncf %43 : vector<8x32xf32> to vector<8x32xbf16>
    %45 = vector.shape_cast %44 : vector<8x32xbf16> to vector<8x4x8xbf16>
    %46 = tpu.transpose %45, [1, 2, 0] : vector<8x4x8xbf16> -> vector<4x8x8xbf16>
    %47 = vector.extract_strided_slice %38 {offsets = [0, 64], sizes = [8, 32], strides = [1, 1]} : vector<8x96xf32> to vector<8x32xf32>
    %48 = arith.truncf %47 : vector<8x32xf32> to vector<8x32xbf16>
    %49 = vector.shape_cast %48 : vector<8x32xbf16> to vector<8x4x8xbf16>
    %50 = tpu.transpose %49, [1, 0, 2] : vector<8x4x8xbf16> -> vector<4x8x8xbf16>
    %cst_20 = arith.constant dense<0.000000e+00> : vector<4x8x8xf32>
    %51 = tpu.matmul %42, %46, %cst_20 {dimension_numbers = #tpu.dot_dimension_numbers<[2], [1], [1], [2], [0, 0, 0, 1, 1, 2], [0], [0]>} : vector<4x8x8xbf16>, vector<4x8x8xbf16>, vector<4x8x8xf32> -> vector<4x8x8xf32>
    %cst_21 = arith.constant dense<0xFF800000> : vector<4x8xf32>
    %52 = vector.multi_reduction <maximumf>, %51, %cst_21 [2] : vector<4x8x8xf32> to vector<4x8xf32>
    %53 = vector.shape_cast %52 : vector<4x8xf32> to vector<4x8x1xf32>
    %54 = vector.broadcast %53 : vector<4x8x1xf32> to vector<4x8x8xf32>
    %55 = arith.subf %51, %54 : vector<4x8x8xf32>
    %56 = math.exp %55 : vector<4x8x8xf32>
    %cst_22 = arith.constant dense<0.000000e+00> : vector<4x8xf32>
    %57 = vector.multi_reduction <add>, %56, %cst_22 [2] : vector<4x8x8xf32> to vector<4x8xf32>
    %58 = vector.shape_cast %57 : vector<4x8xf32> to vector<4x8x1xf32>
    %59 = tpu.reciprocal %58 {approx = true} : vector<4x8x1xf32> -> vector<4x8x1xf32>
    %60 = vector.broadcast %59 : vector<4x8x1xf32> to vector<4x8x8xf32>
    %61 = arith.mulf %56, %60 : vector<4x8x8xf32>
    %62 = arith.truncf %61 : vector<4x8x8xf32> to vector<4x8x8xbf16>
    %cst_23 = arith.constant dense<0.000000e+00> : vector<4x8x8xf32>
    %63 = tpu.matmul %62, %50, %cst_23 {dimension_numbers = #tpu.dot_dimension_numbers<[2], [1], [1], [2], [0, 0, 0, 1, 1, 2], [0], [0]>} : vector<4x8x8xbf16>, vector<4x8x8xbf16>, vector<4x8x8xf32> -> vector<4x8x8xf32>
    %64 = arith.truncf %63 : vector<4x8x8xf32> to vector<4x8x8xbf16>
    %65 = tpu.transpose %64, [1, 0, 2] : vector<4x8x8xbf16> -> vector<8x4x8xbf16>
    %66 = vector.shape_cast %65 : vector<8x4x8xbf16> to vector<8x32xbf16>
    %c0_24 = arith.constant 0 : index
    %c0_25 = arith.constant 0 : index
    %c0_26 = arith.constant 0 : index
    %67 = vector.load %arg7[%c0_24, %c0_25, %c0_26] : memref<1x32x32xbf16, #tpu.memory_space<vmem>>, vector<1x32x32xbf16>
    %68 = vector.shape_cast %67 : vector<1x32x32xbf16> to vector<32x32xbf16>
    %cst_27 = arith.constant dense<0.000000e+00> : vector<8x32xf32>
    %69 = tpu.matmul %66, %68, %cst_27 {dimension_numbers = #tpu.dot_dimension_numbers<[1], [0], [0], [1], [0, 0, 1, 1], [], []>} : vector<8x32xbf16>, vector<32x32xbf16>, vector<8x32xf32> -> vector<8x32xf32>
    %c0_28 = arith.constant 0 : index
    %c0_29 = arith.constant 0 : index
    %c0_30 = arith.constant 0 : index
    %70 = vector.load %arg8[%c0_28, %c0_29, %c0_30] : memref<1x1x32xf32, #tpu.memory_space<vmem>>, vector<1x1x32xf32>
    %71 = vector.shape_cast %70 : vector<1x1x32xf32> to vector<1x32xf32>
    %72 = vector.broadcast %71 : vector<1x32xf32> to vector<8x32xf32>
    %73 = arith.addf %69, %72 : vector<8x32xf32>
    %74 = arith.addf %4, %73 : vector<8x32xf32>
    %c0_31 = arith.constant 0 : index
    %c0_32 = arith.constant 0 : index
    %c0_33 = arith.constant 0 : index
    %75 = vector.load %arg9[%c0_31, %c0_32, %c0_33] : memref<1x1x32xf32, #tpu.memory_space<vmem>>, vector<1x1x32xf32>
    %76 = vector.shape_cast %75 : vector<1x1x32xf32> to vector<1x32xf32>
    %c0_34 = arith.constant 0 : index
    %c0_35 = arith.constant 0 : index
    %c0_36 = arith.constant 0 : index
    %77 = vector.load %arg10[%c0_34, %c0_35, %c0_36] : memref<1x1x32xf32, #tpu.memory_space<vmem>>, vector<1x1x32xf32>
    %78 = vector.shape_cast %77 : vector<1x1x32xf32> to vector<1x32xf32>
    %cst_37 = arith.constant dense<0.000000e+00> : vector<8xf32>
    %79 = vector.multi_reduction <add>, %74, %cst_37 [1] : vector<8x32xf32> to vector<8xf32>
    %80 = vector.shape_cast %79 : vector<8xf32> to vector<8x1xf32>
    %cst_38 = arith.constant 3.200000e+01 : f32
    %81 = vector.broadcast %cst_38 : f32 to vector<8x1xf32>
    %82 = arith.divf %80, %81 : vector<8x1xf32>
    %83 = vector.broadcast %82 : vector<8x1xf32> to vector<8x32xf32>
    %84 = arith.subf %74, %83 : vector<8x32xf32>
    %85 = arith.mulf %84, %84 : vector<8x32xf32>
    %cst_39 = arith.constant dense<0.000000e+00> : vector<8xf32>
    %86 = vector.multi_reduction <add>, %85, %cst_39 [1] : vector<8x32xf32> to vector<8xf32>
    %87 = vector.shape_cast %86 : vector<8xf32> to vector<8x1xf32>
    %cst_40 = arith.constant 3.200000e+01 : f32
    %88 = vector.broadcast %cst_40 : f32 to vector<8x1xf32>
    %89 = arith.divf %87, %88 : vector<8x1xf32>
    %90 = vector.broadcast %82 : vector<8x1xf32> to vector<8x32xf32>
    %91 = arith.subf %74, %90 : vector<8x32xf32>
    %cst_41 = arith.constant 9.99999974E-6 : f32
    %92 = vector.broadcast %cst_41 : f32 to vector<8x1xf32>
    %93 = arith.addf %89, %92 : vector<8x1xf32>
    %94 = math.rsqrt %93 : vector<8x1xf32>
    %95 = vector.broadcast %94 : vector<8x1xf32> to vector<8x32xf32>
    %96 = arith.mulf %91, %95 : vector<8x32xf32>
    %97 = vector.broadcast %76 : vector<1x32xf32> to vector<8x32xf32>
    %98 = arith.mulf %96, %97 : vector<8x32xf32>
    %99 = vector.broadcast %78 : vector<1x32xf32> to vector<8x32xf32>
    %100 = arith.addf %98, %99 : vector<8x32xf32>
    %101 = arith.truncf %100 : vector<8x32xf32> to vector<8x32xbf16>
    %c0_42 = arith.constant 0 : index
    %c0_43 = arith.constant 0 : index
    %c0_44 = arith.constant 0 : index
    %102 = vector.load %arg11[%c0_42, %c0_43, %c0_44] : memref<1x32x128xbf16, #tpu.memory_space<vmem>>, vector<1x32x128xbf16>
    %103 = vector.shape_cast %102 : vector<1x32x128xbf16> to vector<32x128xbf16>
    %cst_45 = arith.constant dense<0.000000e+00> : vector<8x128xf32>
    %104 = tpu.matmul %101, %103, %cst_45 {dimension_numbers = #tpu.dot_dimension_numbers<[1], [0], [0], [1], [0, 0, 1, 1], [], []>} : vector<8x32xbf16>, vector<32x128xbf16>, vector<8x128xf32> -> vector<8x128xf32>
    %c0_46 = arith.constant 0 : index
    %c0_47 = arith.constant 0 : index
    %c0_48 = arith.constant 0 : index
    %105 = vector.load %arg12[%c0_46, %c0_47, %c0_48] : memref<1x1x128xf32, #tpu.memory_space<vmem>>, vector<1x1x128xf32>
    %106 = vector.shape_cast %105 : vector<1x1x128xf32> to vector<1x128xf32>
    %107 = vector.broadcast %106 : vector<1x128xf32> to vector<8x128xf32>
    %108 = arith.addf %104, %107 : vector<8x128xf32>
    %cst_49 = arith.constant 1.702000e+00 : f32
    %109 = vector.broadcast %cst_49 : f32 to vector<8x128xf32>
    %110 = arith.mulf %109, %108 : vector<8x128xf32>
    %111 = arith.negf %110 : vector<8x128xf32>
    %112 = math.exp %111 : vector<8x128xf32>
    %cst_50 = arith.constant 1.000000e+00 : f32
    %113 = vector.broadcast %cst_50 : f32 to vector<8x128xf32>
    %114 = arith.addf %113, %112 : vector<8x128xf32>
    %115 = arith.divf %113, %114 : vector<8x128xf32>
    %116 = arith.mulf %108, %115 : vector<8x128xf32>
    %117 = arith.truncf %116 : vector<8x128xf32> to vector<8x128xbf16>
    %c0_51 = arith.constant 0 : index
    %c0_52 = arith.constant 0 : index
    %c0_53 = arith.constant 0 : index
    %118 = vector.load %arg13[%c0_51, %c0_52, %c0_53] : memref<1x128x32xbf16, #tpu.memory_space<vmem>>, vector<1x128x32xbf16>
    %119 = vector.shape_cast %118 : vector<1x128x32xbf16> to vector<128x32xbf16>
    %cst_54 = arith.constant dense<0.000000e+00> : vector<8x32xf32>
    %120 = tpu.matmul %117, %119, %cst_54 {dimension_numbers = #tpu.dot_dimension_numbers<[1], [0], [0], [1], [0, 0, 1, 1], [], []>} : vector<8x128xbf16>, vector<128x32xbf16>, vector<8x32xf32> -> vector<8x32xf32>
    %c0_55 = arith.constant 0 : index
    %c0_56 = arith.constant 0 : index
    %c0_57 = arith.constant 0 : index
    %121 = vector.load %arg14[%c0_55, %c0_56, %c0_57] : memref<1x1x32xf32, #tpu.memory_space<vmem>>, vector<1x1x32xf32>
    %122 = vector.shape_cast %121 : vector<1x1x32xf32> to vector<1x32xf32>
    %123 = vector.broadcast %122 : vector<1x32xf32> to vector<8x32xf32>
    %124 = arith.addf %120, %123 : vector<8x32xf32>
    %125 = arith.addf %74, %124 : vector<8x32xf32>
    %c0_58 = arith.constant 0 : index
    %c0_59 = arith.constant 0 : index
    %c0_60 = arith.constant 0 : index
    %126 = vector.load %arg15[%c0_58, %c0_59, %c0_60] : memref<1x8x32xf32, #tpu.memory_space<vmem>>, vector<1x8x32xf32>
    %127 = vector.shape_cast %126 : vector<1x8x32xf32> to vector<8x32xf32>
    %128 = vector.shape_cast %125 : vector<8x32xf32> to vector<1x8x32xf32>
    tpu.vector_store %arg15[%c0_58, %c0_59, %c0_60], %128 {strides = array<i32>} : memref<1x8x32xf32, #tpu.memory_space<vmem>>, vector<1x8x32xf32>,
    return
  }
  func.func @transform_0(%arg0: i32, %arg1: i32) -> (i32, i32, i32) {
    %c0_i32 = arith.constant 0 : i32
    %c0_i32_0 = arith.constant 0 : i32
    %c0_i32_1 = arith.constant 0 : i32
    return %arg0, %c0_i32, %c0_i32_0 : i32, i32, i32
  }
  func.func @transform_1(%arg0: i32, %arg1: i32) -> (i32, i32, i32) {
    %c0_i32 = arith.constant 0 : i32
    %c0_i32_0 = arith.constant 0 : i32
    %c0_i32_1 = arith.constant 0 : i32
    return %arg1, %c0_i32, %c0_i32_0 : i32, i32, i32
  }
  func.func @transform_2(%arg0: i32, %arg1: i32) -> (i32, i32, i32) {
    %c0_i32 = arith.constant 0 : i32
    %c0_i32_0 = arith.constant 0 : i32
    %c0_i32_1 = arith.constant 0 : i32
    return %arg1, %c0_i32, %c0_i32_0 : i32, i32, i32
  }
  func.func @transform_3(%arg0: i32, %arg1: i32) -> (i32, i32, i32) {
    %c0_i32 = arith.constant 0 : i32
    %c0_i32_0 = arith.constant 0 : i32
    %c0_i32_1 = arith.constant 0 : i32
    return %arg1, %c0_i32, %c0_i32_0 : i32, i32, i32
  }
  func.func @transform_4(%arg0: i32, %arg1: i32) -> (i32, i32, i32) {
    %c0_i32 = arith.constant 0 : i32
    %c0_i32_0 = arith.constant 0 : i32
    %c0_i32_1 = arith.constant 0 : i32
    return %arg1, %c0_i32, %c0_i32_0 : i32, i32, i32
  }
  func.func @transform_5(%arg0: i32, %arg1: i32) -> (i32, i32, i32) {
    %c0_i32 = arith.constant 0 : i32
    %c0_i32_0 = arith.constant 0 : i32
    %c0_i32_1 = arith.constant 0 : i32
    return %arg1, %c0_i32, %c0_i32_0 : i32, i32, i32
  }
  func.func @transform_6(%arg0: i32, %arg1: i32) -> (i32, i32, i32) {
    %c0_i32 = arith.constant 0 : i32
    %c0_i32_0 = arith.constant 0 : i32
    %c0_i32_1 = arith.constant 0 : i32
    return %arg1, %c0_i32, %c0_i32_0 : i32, i32, i32
  }
  func.func @transform_7(%arg0: i32, %arg1: i32) -> (i32, i32, i32) {
    %c0_i32 = arith.constant 0 : i32
    %c0_i32_0 = arith.constant 0 : i32
    %c0_i32_1 = arith.constant 0 : i32
    return %arg1, %c0_i32, %c0_i32_0 : i32, i32, i32
  }
  func.func @transform_8(%arg0: i32, %arg1: i32) -> (i32, i32, i32) {
    %c0_i32 = arith.constant 0 : i32
    %c0_i32_0 = arith.constant 0 : i32
    %c0_i32_1 = arith.constant 0 : i32
    return %arg1, %c0_i32, %c0_i32_0 : i32, i32, i32
  }
  func.func @transform_9(%arg0: i32, %arg1: i32) -> (i32, i32, i32) {
    %c0_i32 = arith.constant 0 : i32
    %c0_i32_0 = arith.constant 0 : i32
    %c0_i32_1 = arith.constant 0 : i32
    return %arg1, %c0_i32, %c0_i32_0 : i32, i32, i32
  }
  func.func @transform_10(%arg0: i32, %arg1: i32) -> (i32, i32, i32) {
    %c0_i32 = arith.constant 0 : i32
    %c0_i32_0 = arith.constant 0 : i32
    %c0_i32_1 = arith.constant 0 : i32
    return %arg1, %c0_i32, %c0_i32_0 : i32, i32, i32
  }
  func.func @transform_11(%arg0: i32, %arg1: i32) -> (i32, i32, i32) {
    %c0_i32 = arith.constant 0 : i32
    %c0_i32_0 = arith.constant 0 : i32
    %c0_i32_1 = arith.constant 0 : i32
    return %arg1, %c0_i32, %c0_i32_0 : i32, i32, i32
  }
  func.func @transform_12(%arg0: i32, %arg1: i32) -> (i32, i32, i32) {
    %c0_i32 = arith.constant 0 : i32
    %c0_i32_0 = arith.constant 0 : i32
    %c0_i32_1 = arith.constant 0 : i32
    return %arg1, %c0_i32, %c0_i32_0 : i32, i32, i32
  }
  func.func @transform_13(%arg0: i32, %arg1: i32) -> (i32, i32, i32) {
    %c0_i32 = arith.constant 0 : i32
    %c0_i32_0 = arith.constant 0 : i32
    %c0_i32_1 = arith.constant 0 : i32
    return %arg0, %c0_i32, %c0_i32_0 : i32, i32, i32
  }
}

</mosaic_0001>

<llo_original>
// kernel: tpu_custom_call.1
$region0: #{tpu_custom_call.1}
  #allocation0 [shape = 'u32[]', space=smem, size = 0x4, offset = 0x4, fixed_abs, tag = 'smem constant byte address 0x4 - core index']
  #allocation1 [shape = 'u32[144,128]{1,0:T(1,128)}', space=vmem, size = 0x12000, scoped, tag = 'internal scratch']
  %s0 = inlined_call_operand.vmem [shape: f32[2,8,32], index: 0, kind: input, shape index: {}]
  %s1 = inlined_call_operand.vmem [shape: f32[2,1,32], index: 1, kind: input, shape index: {}]
  %s2 = inlined_call_operand.vmem [shape: f32[2,1,32], index: 2, kind: input, shape index: {}]
  %s3 = inlined_call_operand.vmem [shape: bf16[2,32,96], index: 3, kind: input, shape index: {}]
  %s4 = inlined_call_operand.vmem [shape: f32[2,1,96], index: 4, kind: input, shape index: {}]
  %s5 = inlined_call_operand.vmem [shape: bf16[2,32,32], index: 5, kind: input, shape index: {}]
  %s6 = inlined_call_operand.vmem [shape: f32[2,1,32], index: 6, kind: input, shape index: {}]
  %s7 = inlined_call_operand.vmem [shape: f32[2,1,32], index: 7, kind: input, shape index: {}]
  %s8 = inlined_call_operand.vmem [shape: f32[2,1,32], index: 8, kind: input, shape index: {}]
  %s9 = inlined_call_operand.vmem [shape: bf16[2,32,128], index: 9, kind: input, shape index: {}]
  %s10 = inlined_call_operand.vmem [shape: f32[2,1,128], index: 10, kind: input, shape index: {}]
  %s11 = inlined_call_operand.vmem [shape: bf16[2,128,32], index: 11, kind: input, shape index: {}]
  %s12 = inlined_call_operand.vmem [shape: f32[2,1,32], index: 12, kind: input, shape index: {}]
  %s13 = inlined_call_operand.hbm [shape: f32[2,8,32], index: 13, kind: output, shape index: {}]
  %s14 = sld [smem:[#allocation0]]
  $region89: #{tpu_custom_call.1} parent=0
    _
  %s16 = ssub.s32 1, %s14
  %s17 = scalar_select 0, %s16, %s14
  $region1: #{tpu_custom_call.1} parent=0
    #allocation2 [shape = 'u8[8192]{0}', space=vmem, size = 0x2000, scoped, tag = 'output window, operand 0']
    #allocation3 [shape = 's32[2]{0}', space=sflag, size = 0x8, scoped, tag = 'scoped memory for tpu_custom_call.1']
    %18 = vsyncpa [#allocation3], 0
    %s19 = scalar_lea.sflag [#allocation3], 1
    %20 = vsyncpa %s19, 0
    loop: start=0, step=1, limit=6
    $region2: #{tpu_custom_call.1} parent=1 // loop_pre_header
      _
    $region3: #{tpu_custom_call.1} parent=1 // loop_header
      %s22 = sphi 0, %s26
      %p23 = scmp.ge.s32.totalorder %s22, 6
      %s29 = sphi 0, %s41
      %s30 = sphi 0, %s37
      %s31 = sphi 0, %s29
      %s32 = sphi 0, %s30
      %s33 = sphi 0, %s31
      %s34 = sphi 0, %s32
      %s44 = sphi 0, %s46
      %s47 = sphi 0, %s44
      %s48 = sphi 0, %s47
      %s64 = sphi 0, %s48
      %s70 = sphi 0, %s72
      %s73 = sphi 0, %s70
      %s74 = sphi 0, %s73
      %s90 = sphi 0, %s74
      %s96 = sphi 0, %s98
      %s99 = sphi 0, %s96
      %s100 = sphi 0, %s99
      %s116 = sphi 0, %s100
      %s122 = sphi 0, %s124
      %s125 = sphi 0, %s122
      %s126 = sphi 0, %s125
      %s142 = sphi 0, %s126
      %s148 = sphi 0, %s150
      %s151 = sphi 0, %s148
      %s152 = sphi 0, %s151
      %s168 = sphi 0, %s152
      %s174 = sphi 0, %s176
      %s177 = sphi 0, %s174
      %s178 = sphi 0, %s177
      %s194 = sphi 0, %s178
      %s200 = sphi 0, %s202
      %s203 = sphi 0, %s200
      %s204 = sphi 0, %s203
      %s220 = sphi 0, %s204
      %s226 = sphi 0, %s228
      %s229 = sphi 0, %s226
      %s230 = sphi 0, %s229
      %s246 = sphi 0, %s230
      %s252 = sphi 0, %s254
      %s255 = sphi 0, %s252
      %s256 = sphi 0, %s255
      %s272 = sphi 0, %s256
      %s278 = sphi 0, %s280
      %s281 = sphi 0, %s278
      %s282 = sphi 0, %s281
      %s298 = sphi 0, %s282
      %s304 = sphi 0, %s306
      %s307 = sphi 0, %s304
      %s308 = sphi 0, %s307
      %s324 = sphi 0, %s308
      %s330 = sphi 0, %s332
      %s333 = sphi 0, %s330
      %s334 = sphi 0, %s333
      %s350 = sphi 0, %s334
      %s356 = sphi 0, %s358
      %s359 = sphi 0, %s356
      %s360 = sphi 0, %s359
      %s376 = sphi 0, %s360
      %s382 = sphi 0, %s384
      %s385 = sphi 0, %s382
      %s386 = sphi 0, %s385
      %s402 = sphi 0, %s386
    $region4: #{tpu_custom_call.1} parent=1 // loop_header_branch
      %25 = sbr.rel (%p23) target = $region8
    $region5: #{tpu_custom_call.1} parent=1 // loop_body
      %s27 = ssub.s32 %s22, 1
      %s28 = ssub.s32 %s22, 2
      %s35 = sadd.s32 1, %s30
      %p36 = scmp.ge.s32.totalorder %s35, 2
      %s37 = scalar_select %p36, 0, %s35
      %s38 = sadd.s32 1, %s29
      %s39 = scalar_select %p36, %s38, %s29
      %p40 = scmp.ge.s32.totalorder %s39, 2
      %s41 = scalar_select %p40, 0, %s39
      %s42 = ssub.s32 %s29, %s41
      %p43 = scmp.eq.s32.totalorder %s42, 0
      %s45 = sadd.s32 %s44, 1
      %s46 = scalar_select %p43, %s44, %s45
      %p49 = pneg %p43
      %p50 = scmp.eq.s32.totalorder %s22, 3
      %p51 = por %p49, %p50
      %p52 = scmp.ne.s32.totalorder %s44, %s47
      %p53 = scmp.eq.s32.totalorder %s22, 0
      %p54 = por %p52, %p53
      %p55 = scmp.ne.s32.totalorder %s44, %s47
      %p56 = scmp.eq.s32.totalorder %s27, 3
      %p57 = por %p55, %p56
      %p58 = scmp.ne.s32.totalorder %s47, %s48
      %p59 = scmp.eq.s32.totalorder %s27, 0
      %p60 = por %p58, %p59
      %p61 = scmp.ne.s32.totalorder %s47, %s48
      %p62 = scmp.eq.s32.totalorder %s28, 3
      %p63 = por %p61, %p62
      %p65 = scmp.ne.s32.totalorder %s48, %s64
      %p66 = scmp.eq.s32.totalorder %s28, 0
      %p67 = por %p65, %p66
      %s68 = ssub.s32 %s30, %s37
      %p69 = scmp.eq.s32.totalorder %s68, 0
      %s71 = sadd.s32 %s70, 1
      %s72 = scalar_select %p69, %s70, %s71
      %p75 = pneg %p69
      %p76 = scmp.eq.s32.totalorder %s22, 3
      %p77 = por %p75, %p76
      %p78 = scmp.ne.s32.totalorder %s70, %s73
      %p79 = scmp.eq.s32.totalorder %s22, 0
      %p80 = por %p78, %p79
      %p81 = scmp.ne.s32.totalorder %s70, %s73
      %p82 = scmp.eq.s32.totalorder %s27, 3
      %p83 = por %p81, %p82
      %p84 = scmp.ne.s32.totalorder %s73, %s74
      %p85 = scmp.eq.s32.totalorder %s27, 0
      %p86 = por %p84, %p85
      %p87 = scmp.ne.s32.totalorder %s73, %s74
      %p88 = scmp.eq.s32.totalorder %s28, 3
      %p89 = por %p87, %p88
      %p91 = scmp.ne.s32.totalorder %s74, %s90
      %p92 = scmp.eq.s32.totalorder %s28, 0
      %p93 = por %p91, %p92
      %s94 = ssub.s32 %s30, %s37
      %p95 = scmp.eq.s32.totalorder %s94, 0
      %s97 = sadd.s32 %s96, 1
      %s98 = scalar_select %p95, %s96, %s97
      %p101 = pneg %p95
      %p102 = scmp.eq.s32.totalorder %s22, 3
      %p103 = por %p101, %p102
      %p104 = scmp.ne.s32.totalorder %s96, %s99
      %p105 = scmp.eq.s32.totalorder %s22, 0
      %p106 = por %p104, %p105
      %p107 = scmp.ne.s32.totalorder %s96, %s99
      %p108 = scmp.eq.s32.totalorder %s27, 3
      %p109 = por %p107, %p108
      %p110 = scmp.ne.s32.totalorder %s99, %s100
      %p111 = scmp.eq.s32.totalorder %s27, 0
      %p112 = por %p110, %p111
      %p113 = scmp.ne.s32.totalorder %s99, %s100
      %p114 = scmp.eq.s32.totalorder %s28, 3
      %p115 = por %p113, %p114
      %p117 = scmp.ne.s32.totalorder %s100, %s116
      %p118 = scmp.eq.s32.totalorder %s28, 0
      %p119 = por %p117, %p118
      %s120 = ssub.s32 %s30, %s37
      %p121 = scmp.eq.s32.totalorder %s120, 0
      %s123 = sadd.s32 %s122, 1
      %s124 = scalar_select %p121, %s122, %s123
      %p127 = pneg %p121
      %p128 = scmp.eq.s32.totalorder %s22, 3
      %p129 = por %p127, %p128
      %p130 = scmp.ne.s32.totalorder %s122, %s125
      %p131 = scmp.eq.s32.totalorder %s22, 0
      %p132 = por %p130, %p131
      %p133 = scmp.ne.s32.totalorder %s122, %s125
      %p134 = scmp.eq.s32.totalorder %s27, 3
      %p135 = por %p133, %p134
      %p136 = scmp.ne.s32.totalorder %s125, %s126
      %p137 = scmp.eq.s32.totalorder %s27, 0
      %p138 = por %p136, %p137
      %p139 = scmp.ne.s32.totalorder %s125, %s126
      %p140 = scmp.eq.s32.totalorder %s28, 3
      %p141 = por %p139, %p140
      %p143 = scmp.ne.s32.totalorder %s126, %s142
      %p144 = scmp.eq.s32.totalorder %s28, 0
      %p145 = por %p143, %p144
      %s146 = ssub.s32 %s30, %s37
      %p147 = scmp.eq.s32.totalorder %s146, 0
      %s149 = sadd.s32 %s148, 1
      %s150 = scalar_select %p147, %s148, %s149
      %p153 = pneg %p147
      %p154 = scmp.eq.s32.totalorder %s22, 3
      %p155 = por %p153, %p154
      %p156 = scmp.ne.s32.totalorder %s148, %s151
      %p157 = scmp.eq.s32.totalorder %s22, 0
      %p158 = por %p156, %p157
      %p159 = scmp.ne.s32.totalorder %s148, %s151
      %p160 = scmp.eq.s32.totalorder %s27, 3
      %p161 = por %p159, %p160
      %p162 = scmp.ne.s32.totalorder %s151, %s152
      %p163 = scmp.eq.s32.totalorder %s27, 0
      %p164 = por %p162, %p163
      %p165 = scmp.ne.s32.totalorder %s151, %s152
      %p166 = scmp.eq.s32.totalorder %s28, 3
      %p167 = por %p165, %p166
      %p169 = scmp.ne.s32.totalorder %s152, %s168
      %p170 = scmp.eq.s32.totalorder %s28, 0
      %p171 = por %p169, %p170
      %s172 = ssub.s32 %s30, %s37
      %p173 = scmp.eq.s32.totalorder %s172, 0
      %s175 = sadd.s32 %s174, 1
      %s176 = scalar_select %p173, %s174, %s175
      %p179 = pneg %p173
      %p180 = scmp.eq.s32.totalorder %s22, 3
      %p181 = por %p179, %p180
      %p182 = scmp.ne.s32.totalorder %s174, %s177
      %p183 = scmp.eq.s32.totalorder %s22, 0
      %p184 = por %p182, %p183
      %p185 = scmp.ne.s32.totalorder %s174, %s177
      %p186 = scmp.eq.s32.totalorder %s27, 3
      %p187 = por %p185, %p186
      %p188 = scmp.ne.s32.totalorder %s177, %s178
      %p189 = scmp.eq.s32.totalorder %s27, 0
      %p190 = por %p188, %p189
      %p191 = scmp.ne.s32.totalorder %s177, %s178
      %p192 = scmp.eq.s32.totalorder %s28, 3
      %p193 = por %p191, %p192
      %p195 = scmp.ne.s32.totalorder %s178, %s194
      %p196 = scmp.eq.s32.totalorder %s28, 0
      %p197 = por %p195, %p196
      %s198 = ssub.s32 %s30, %s37
      %p199 = scmp.eq.s32.totalorder %s198, 0
      %s201 = sadd.s32 %s200, 1
      %s202 = scalar_select %p199, %s200, %s201
      %p205 = pneg %p199
      %p206 = scmp.eq.s32.totalorder %s22, 3
      %p207 = por %p205, %p206
      %p208 = scmp.ne.s32.totalorder %s200, %s203
      %p209 = scmp.eq.s32.totalorder %s22, 0
      %p210 = por %p208, %p209
      %p211 = scmp.ne.s32.totalorder %s200, %s203
      %p212 = scmp.eq.s32.totalorder %s27, 3
      %p213 = por %p211, %p212
      %p214 = scmp.ne.s32.totalorder %s203, %s204
      %p215 = scmp.eq.s32.totalorder %s27, 0
      %p216 = por %p214, %p215
      %p217 = scmp.ne.s32.totalorder %s203, %s204
      %p218 = scmp.eq.s32.totalorder %s28, 3
      %p219 = por %p217, %p218
      %p221 = scmp.ne.s32.totalorder %s204, %s220
      %p222 = scmp.eq.s32.totalorder %s28, 0
      %p223 = por %p221, %p222
      %s224 = ssub.s32 %s30, %s37
      %p225 = scmp.eq.s32.totalorder %s224, 0
      %s227 = sadd.s32 %s226, 1
      %s228 = scalar_select %p225, %s226, %s227
      %p231 = pneg %p225
      %p232 = scmp.eq.s32.totalorder %s22, 3
      %p233 = por %p231, %p232
      %p234 = scmp.ne.s32.totalorder %s226, %s229
      %p235 = scmp.eq.s32.totalorder %s22, 0
      %p236 = por %p234, %p235
      %p237 = scmp.ne.s32.totalorder %s226, %s229
      %p238 = scmp.eq.s32.totalorder %s27, 3
      %p239 = por %p237, %p238
      %p240 = scmp.ne.s32.totalorder %s229, %s230
      %p241 = scmp.eq.s32.totalorder %s27, 0
      %p242 = por %p240, %p241
      %p243 = scmp.ne.s32.totalorder %s229, %s230
      %p244 = scmp.eq.s32.totalorder %s28, 3
      %p245 = por %p243, %p244
      %p247 = scmp.ne.s32.totalorder %s230, %s246
      %p248 = scmp.eq.s32.totalorder %s28, 0
      %p249 = por %p247, %p248
      %s250 = ssub.s32 %s30, %s37
      %p251 = scmp.eq.s32.totalorder %s250, 0
      %s253 = sadd.s32 %s252, 1
      %s254 = scalar_select %p251, %s252, %s253
      %p257 = pneg %p251
      %p258 = scmp.eq.s32.totalorder %s22, 3
      %p259 = por %p257, %p258
      %p260 = scmp.ne.s32.totalorder %s252, %s255
      %p261 = scmp.eq.s32.totalorder %s22, 0
      %p262 = por %p260, %p261
      %p263 = scmp.ne.s32.totalorder %s252, %s255
      %p264 = scmp.eq.s32.totalorder %s27, 3
      %p265 = por %p263, %p264
      %p266 = scmp.ne.s32.totalorder %s255, %s256
      %p267 = scmp.eq.s32.totalorder %s27, 0
      %p268 = por %p266, %p267
      %p269 = scmp.ne.s32.totalorder %s255, %s256
      %p270 = scmp.eq.s32.totalorder %s28, 3
      %p271 = por %p269, %p270
      %p273 = scmp.ne.s32.totalorder %s256, %s272
      %p274 = scmp.eq.s32.totalorder %s28, 0
      %p275 = por %p273, %p274
      %s276 = ssub.s32 %s30, %s37
      %p277 = scmp.eq.s32.totalorder %s276, 0
      %s279 = sadd.s32 %s278, 1
      %s280 = scalar_select %p277, %s278, %s279
      %p283 = pneg %p277
      %p284 = scmp.eq.s32.totalorder %s22, 3
      %p285 = por %p283, %p284
      %p286 = scmp.ne.s32.totalorder %s278, %s281
      %p287 = scmp.eq.s32.totalorder %s22, 0
      %p288 = por %p286, %p287
      %p289 = scmp.ne.s32.totalorder %s278, %s281
      %p290 = scmp.eq.s32.totalorder %s27, 3
      %p291 = por %p289, %p290
      %p292 = scmp.ne.s32.totalorder %s281, %s282
      %p293 = scmp.eq.s32.totalorder %s27, 0
      %p294 = por %p292, %p293
      %p295 = scmp.ne.s32.totalorder %s281, %s282
      %p296 = scmp.eq.s32.totalorder %s28, 3
      %p297 = por %p295, %p296
      %p299 = scmp.ne.s32.totalorder %s282, %s298
      %p300 = scmp.eq.s32.totalorder %s28, 0
      %p301 = por %p299, %p300
      %s302 = ssub.s32 %s30, %s37
      %p303 = scmp.eq.s32.totalorder %s302, 0
      %s305 = sadd.s32 %s304, 1
      %s306 = scalar_select %p303, %s304, %s305
      %p309 = pneg %p303
      %p310 = scmp.eq.s32.totalorder %s22, 3
      %p311 = por %p309, %p310
      %p312 = scmp.ne.s32.totalorder %s304, %s307
      %p313 = scmp.eq.s32.totalorder %s22, 0
      %p314 = por %p312, %p313
      %p315 = scmp.ne.s32.totalorder %s304, %s307
      %p316 = scmp.eq.s32.totalorder %s27, 3
      %p317 = por %p315, %p316
      %p318 = scmp.ne.s32.totalorder %s307, %s308
      %p319 = scmp.eq.s32.totalorder %s27, 0
      %p320 = por %p318, %p319
      %p321 = scmp.ne.s32.totalorder %s307, %s308
      %p322 = scmp.eq.s32.totalorder %s28, 3
      %p323 = por %p321, %p322
      %p325 = scmp.ne.s32.totalorder %s308, %s324
      %p326 = scmp.eq.s32.totalorder %s28, 0
      %p327 = por %p325, %p326
      %s328 = ssub.s32 %s30, %s37
      %p329 = scmp.eq.s32.totalorder %s328, 0
      %s331 = sadd.s32 %s330, 1
      %s332 = scalar_select %p329, %s330, %s331
      %p335 = pneg %p329
      %p336 = scmp.eq.s32.totalorder %s22, 3
      %p337 = por %p335, %p336
      %p338 = scmp.ne.s32.totalorder %s330, %s333
      %p339 = scmp.eq.s32.totalorder %s22, 0
      %p340 = por %p338, %p339
      %p341 = scmp.ne.s32.totalorder %s330, %s333
      %p342 = scmp.eq.s32.totalorder %s27, 3
      %p343 = por %p341, %p342
      %p344 = scmp.ne.s32.totalorder %s333, %s334
      %p345 = scmp.eq.s32.totalorder %s27, 0
      %p346 = por %p344, %p345
      %p347 = scmp.ne.s32.totalorder %s333, %s334
      %p348 = scmp.eq.s32.totalorder %s28, 3
      %p349 = por %p347, %p348
      %p351 = scmp.ne.s32.totalorder %s334, %s350
      %p352 = scmp.eq.s32.totalorder %s28, 0
      %p353 = por %p351, %p352
      %s354 = ssub.s32 %s30, %s37
      %p355 = scmp.eq.s32.totalorder %s354, 0
      %s357 = sadd.s32 %s356, 1
      %s358 = scalar_select %p355, %s356, %s357
      %p361 = pneg %p355
      %p362 = scmp.eq.s32.totalorder %s22, 3
      %p363 = por %p361, %p362
      %p364 = scmp.ne.s32.totalorder %s356, %s359
      %p365 = scmp.eq.s32.totalorder %s22, 0
      %p366 = por %p364, %p365
      %p367 = scmp.ne.s32.totalorder %s356, %s359
      %p368 = scmp.eq.s32.totalorder %s27, 3
      %p369 = por %p367, %p368
      %p370 = scmp.ne.s32.totalorder %s359, %s360
      %p371 = scmp.eq.s32.totalorder %s27, 0
      %p372 = por %p370, %p371
      %p373 = scmp.ne.s32.totalorder %s359, %s360
      %p374 = scmp.eq.s32.totalorder %s28, 3
      %p375 = por %p373, %p374
      %p377 = scmp.ne.s32.totalorder %s360, %s376
      %p378 = scmp.eq.s32.totalorder %s28, 0
      %p379 = por %p377, %p378
      %s380 = ssub.s32 %s29, %s41
      %p381 = scmp.eq.s32.totalorder %s380, 0
      %s383 = sadd.s32 %s382, 1
      %s384 = scalar_select %p381, %s382, %s383
      %p387 = pneg %p381
      %p388 = scmp.eq.s32.totalorder %s22, 3
      %p389 = por %p387, %p388
      %p390 = scmp.ne.s32.totalorder %s382, %s385
      %p391 = scmp.eq.s32.totalorder %s22, 0
      %p392 = por %p390, %p391
      %p393 = scmp.ne.s32.totalorder %s382, %s385
      %p394 = scmp.eq.s32.totalorder %s27, 3
      %p395 = por %p393, %p394
      %p396 = scmp.ne.s32.totalorder %s385, %s386
      %p397 = scmp.eq.s32.totalorder %s27, 0
      %p398 = por %p396, %p397
      %p399 = scmp.ne.s32.totalorder %s385, %s386
      %p400 = scmp.eq.s32.totalorder %s28, 3
      %p401 = por %p399, %p400
      %p403 = scmp.ne.s32.totalorder %s386, %s402
      %p404 = scmp.eq.s32.totalorder %s28, 0
      %p405 = por %p403, %p404
      %p406 = scmp.le.s32.totalorder 1, %s22
      %p407 = scmp.lt.s32.totalorder %s22, 5
      %p408 = pnand %p406, %p407
      %p409 = pneg %p408
      // Predicated region
      $region9: #{tpu_custom_call.1} parent=5 // pred_check
        _
      $region10: #{tpu_custom_call.1} parent=5 // pred_check_branch
        %411 = sbr.rel (%p408) target = $region12
      $region11: #{tpu_custom_call.1} parent=5 // pred_region
        %s412 = ssub.s32 %s22, 1
      $region12: #{tpu_custom_call.1} parent=5 // pred_fallthru
        _
      %p413 = scmp.lt.s32.totalorder %s22, 4
      // Predicated region
      $region13: #{tpu_custom_call.1} parent=5 // pred_check
        %p414 = pneg %p413
      $region14: #{tpu_custom_call.1} parent=5 // pred_check_branch
        %416 = sbr.rel (%p414) target = $region16
      $region15: #{tpu_custom_call.1} parent=5 // pred_region
        // Predicated region
        $region17: #{tpu_custom_call.1} parent=15 // pred_check
          %p417 = pneg %p54
        $region18: #{tpu_custom_call.1} parent=15 // pred_check_branch
          %419 = sbr.rel (%p417) target = $region20
        $region19: #{tpu_custom_call.1} parent=15 // pred_region
          %p420 = scmp.lt.s32.totalorder %s29, 1
          %s421 = scalar_select %p420, %s29, 1
          %s422 = smul.addr %s421, 8
          %s423 = scalar_lea.vmem %s0, %s422
        $region20: #{tpu_custom_call.1} parent=15 // pred_fallthru
          _
        // Predicated region
        $region21: #{tpu_custom_call.1} parent=15 // pred_check
          %p424 = pneg %p80
        $region22: #{tpu_custom_call.1} parent=15 // pred_check_branch
          %426 = sbr.rel (%p424) target = $region24
        $region23: #{tpu_custom_call.1} parent=15 // pred_region
          %p427 = scmp.lt.s32.totalorder %s30, 1
          %s428 = scalar_select %p427, %s30, 1
          %s429 = scalar_lea.vmem %s1, %s428
        $region24: #{tpu_custom_call.1} parent=15 // pred_fallthru
          _
        // Predicated region
        $region25: #{tpu_custom_call.1} parent=15 // pred_check
          %p430 = pneg %p106
        $region26: #{tpu_custom_call.1} parent=15 // pred_check_branch
          %432 = sbr.rel (%p430) target = $region28
        $region27: #{tpu_custom_call.1} parent=15 // pred_region
          %p433 = scmp.lt.s32.totalorder %s30, 1
          %s434 = scalar_select %p433, %s30, 1
          %s435 = scalar_lea.vmem %s2, %s434
        $region28: #{tpu_custom_call.1} parent=15 // pred_fallthru
          _
        // Predicated region
        $region29: #{tpu_custom_call.1} parent=15 // pred_check
          %p436 = pneg %p132
        $region30: #{tpu_custom_call.1} parent=15 // pred_check_branch
          %438 = sbr.rel (%p436) target = $region32
        $region31: #{tpu_custom_call.1} parent=15 // pred_region
          %p439 = scmp.lt.s32.totalorder %s30, 1
          %s440 = scalar_select %p439, %s30, 1
          %s441 = smul.addr %s440, 4
          %s442 = smul.addr %s441, 4
          %s443 = scalar_lea.vmem %s3, %s442
        $region32: #{tpu_custom_call.1} parent=15 // pred_fallthru
          _
        // Predicated region
        $region33: #{tpu_custom_call.1} parent=15 // pred_check
          %p444 = pneg %p158
        $region34: #{tpu_custom_call.1} parent=15 // pred_check_branch
          %446 = sbr.rel (%p444) target = $region36
        $region35: #{tpu_custom_call.1} parent=15 // pred_region
          %p447 = scmp.lt.s32.totalorder %s30, 1
          %s448 = scalar_select %p447, %s30, 1
          %s449 = scalar_lea.vmem %s4, %s448
        $region36: #{tpu_custom_call.1} parent=15 // pred_fallthru
          _
        // Predicated region
        $region37: #{tpu_custom_call.1} parent=15 // pred_check
          %p450 = pneg %p184
        $region38: #{tpu_custom_call.1} parent=15 // pred_check_branch
          %452 = sbr.rel (%p450) target = $region40
        $region39: #{tpu_custom_call.1} parent=15 // pred_region
          %p453 = scmp.lt.s32.totalorder %s30, 1
          %s454 = scalar_select %p453, %s30, 1
          %s455 = smul.addr %s454, 4
          %s456 = smul.addr %s455, 4
          %s457 = scalar_lea.vmem %s5, %s456
        $region40: #{tpu_custom_call.1} parent=15 // pred_fallthru
          _
        // Predicated region
        $region41: #{tpu_custom_call.1} parent=15 // pred_check
          %p458 = pneg %p210
        $region42: #{tpu_custom_call.1} parent=15 // pred_check_branch
          %460 = sbr.rel (%p458) target = $region44
        $region43: #{tpu_custom_call.1} parent=15 // pred_region
          %p461 = scmp.lt.s32.totalorder %s30, 1
          %s462 = scalar_select %p461, %s30, 1
          %s463 = scalar_lea.vmem %s6, %s462
        $region44: #{tpu_custom_call.1} parent=15 // pred_fallthru
          _
        // Predicated region
        $region45: #{tpu_custom_call.1} parent=15 // pred_check
          %p464 = pneg %p236
        $region46: #{tpu_custom_call.1} parent=15 // pred_check_branch
          %466 = sbr.rel (%p464) target = $region48
        $region47: #{tpu_custom_call.1} parent=15 // pred_region
          %p467 = scmp.lt.s32.totalorder %s30, 1
          %s468 = scalar_select %p467, %s30, 1
          %s469 = scalar_lea.vmem %s7, %s468
        $region48: #{tpu_custom_call.1} parent=15 // pred_fallthru
          _
        // Predicated region
        $region49: #{tpu_custom_call.1} parent=15 // pred_check
          %p470 = pneg %p262
        $region50: #{tpu_custom_call.1} parent=15 // pred_check_branch
          %472 = sbr.rel (%p470) target = $region52
        $region51: #{tpu_custom_call.1} parent=15 // pred_region
          %p473 = scmp.lt.s32.totalorder %s30, 1
          %s474 = scalar_select %p473, %s30, 1
          %s475 = scalar_lea.vmem %s8, %s474
        $region52: #{tpu_custom_call.1} parent=15 // pred_fallthru
          _
        // Predicated region
        $region53: #{tpu_custom_call.1} parent=15 // pred_check
          %p476 = pneg %p288
        $region54: #{tpu_custom_call.1} parent=15 // pred_check_branch
          %478 = sbr.rel (%p476) target = $region56
        $region55: #{tpu_custom_call.1} parent=15 // pred_region
          %p479 = scmp.lt.s32.totalorder %s30, 1
          %s480 = scalar_select %p479, %s30, 1
          %s481 = smul.addr %s480, 4
          %s482 = smul.addr %s481, 4
          %s483 = scalar_lea.vmem %s9, %s482
        $region56: #{tpu_custom_call.1} parent=15 // pred_fallthru
          _
        // Predicated region
        $region57: #{tpu_custom_call.1} parent=15 // pred_check
          %p484 = pneg %p314
        $region58: #{tpu_custom_call.1} parent=15 // pred_check_branch
          %486 = sbr.rel (%p484) target = $region60
        $region59: #{tpu_custom_call.1} parent=15 // pred_region
          %p487 = scmp.lt.s32.totalorder %s30, 1
          %s488 = scalar_select %p487, %s30, 1
          %s489 = scalar_lea.vmem %s10, %s488
        $region60: #{tpu_custom_call.1} parent=15 // pred_fallthru
          _
        // Predicated region
        $region61: #{tpu_custom_call.1} parent=15 // pred_check
          %p490 = pneg %p340
        $region62: #{tpu_custom_call.1} parent=15 // pred_check_branch
          %492 = sbr.rel (%p490) target = $region64
        $region63: #{tpu_custom_call.1} parent=15 // pred_region
          %p493 = scmp.lt.s32.totalorder %s30, 1
          %s494 = scalar_select %p493, %s30, 1
          %s495 = smul.addr %s494, 16
          %s496 = smul.addr %s495, 4
          %s497 = scalar_lea.vmem %s11, %s496
        $region64: #{tpu_custom_call.1} parent=15 // pred_fallthru
          _
        // Predicated region
        $region65: #{tpu_custom_call.1} parent=15 // pred_check
          %p498 = pneg %p366
        $region66: #{tpu_custom_call.1} parent=15 // pred_check_branch
          %500 = sbr.rel (%p498) target = $region68
        $region67: #{tpu_custom_call.1} parent=15 // pred_region
          %p501 = scmp.lt.s32.totalorder %s30, 1
          %s502 = scalar_select %p501, %s30, 1
          %s503 = scalar_lea.vmem %s12, %s502
        $region68: #{tpu_custom_call.1} parent=15 // pred_fallthru
          _
      $region16: #{tpu_custom_call.1} parent=5 // pred_fallthru
        _
      %p504 = scmp.le.s32.totalorder 1, %s22
      %p505 = scmp.lt.s32.totalorder %s22, 5
      %p506 = pnand %p504, %p505
      %p507 = pneg %p506
      // Predicated region
      $region69: #{tpu_custom_call.1} parent=5 // pred_check
        _
      $region70: #{tpu_custom_call.1} parent=5 // pred_check_branch
        %509 = sbr.rel (%p506) target = $region72
      $region71: #{tpu_custom_call.1} parent=5 // pred_region
        %s510 = ssub.s32 %s22, 1
        %p511 = scmp.lt.s32.totalorder %s31, 1
        %s512 = scalar_select %p511, %s31, 1
        %s513 = smul.addr %s512, 8
        %s514 = scalar_lea.vmem %s0, %s513
        %p515 = pneg %p60
        %p516 = pneg %p57
        %p517 = scmp.lt.s32.totalorder %s32, 1
        %s518 = scalar_select %p517, %s32, 1
        %s519 = scalar_lea.vmem %s1, %s518
        %p520 = pneg %p86
        %p521 = pneg %p83
        %p522 = scmp.lt.s32.totalorder %s32, 1
        %s523 = scalar_select %p522, %s32, 1
        %s524 = scalar_lea.vmem %s2, %s523
        %p525 = pneg %p112
        %p526 = pneg %p109
        %p527 = scmp.lt.s32.totalorder %s32, 1
        %s528 = scalar_select %p527, %s32, 1
        %s529 = smul.addr %s528, 4
        %s530 = smul.addr %s529, 4
        %s531 = scalar_lea.vmem %s3, %s530
        %p532 = pneg %p138
        %p533 = pneg %p135
        %p534 = scmp.lt.s32.totalorder %s32, 1
        %s535 = scalar_select %p534, %s32, 1
        %s536 = scalar_lea.vmem %s4, %s535
        %p537 = pneg %p164
        %p538 = pneg %p161
        %p539 = scmp.lt.s32.totalorder %s32, 1
        %s540 = scalar_select %p539, %s32, 1
        %s541 = smul.addr %s540, 4
        %s542 = smul.addr %s541, 4
        %s543 = scalar_lea.vmem %s5, %s542
        %p544 = pneg %p190
        %p545 = pneg %p187
        %p546 = scmp.lt.s32.totalorder %s32, 1
        %s547 = scalar_select %p546, %s32, 1
        %s548 = scalar_lea.vmem %s6, %s547
        %p549 = pneg %p216
        %p550 = pneg %p213
        %p551 = scmp.lt.s32.totalorder %s32, 1
        %s552 = scalar_select %p551, %s32, 1
        %s553 = scalar_lea.vmem %s7, %s552
        %p554 = pneg %p242
        %p555 = pneg %p239
        %p556 = scmp.lt.s32.totalorder %s32, 1
        %s557 = scalar_select %p556, %s32, 1
        %s558 = scalar_lea.vmem %s8, %s557
        %p559 = pneg %p268
        %p560 = pneg %p265
        %p561 = scmp.lt.s32.totalorder %s32, 1
        %s562 = scalar_select %p561, %s32, 1
        %s563 = smul.addr %s562, 4
        %s564 = smul.addr %s563, 4
        %s565 = scalar_lea.vmem %s9, %s564
        %p566 = pneg %p294
        %p567 = pneg %p291
        %p568 = scmp.lt.s32.totalorder %s32, 1
        %s569 = scalar_select %p568, %s32, 1
        %s570 = scalar_lea.vmem %s10, %s569
        %p571 = pneg %p320
        %p572 = pneg %p317
        %p573 = scmp.lt.s32.totalorder %s32, 1
        %s574 = scalar_select %p573, %s32, 1
        %s575 = smul.addr %s574, 16
        %s576 = smul.addr %s575, 4
        %s577 = scalar_lea.vmem %s11, %s576
        %p578 = pneg %p346
        %p579 = pneg %p343
        %p580 = scmp.lt.s32.totalorder %s32, 1
        %s581 = scalar_select %p580, %s32, 1
        %s582 = scalar_lea.vmem %s12, %s581
        %p583 = pneg %p372
        %p584 = pneg %p369
        %p585 = pneg %p398
        %p586 = pneg %p395
        %s587 = sand.u32 %s385, 1
        %s588 = scalar_lea.sflag [#allocation3], %s587
        %s589 = sand.u32 %s385, 1
        %s590 = smul.addr %s589, 8
        %s591 = scalar_lea.vmem [#allocation2], %s590
        %p592 = scmp.lt.s32.totalorder %s31, 1
        %s593 = scalar_select %p592, %s31, 1
        %s594 = smul.addr %s593, 8
        %s595 = scalar_lea.vmem %s0, %s594
        %p596 = scmp.lt.s32.totalorder %s32, 1
        %s597 = scalar_select %p596, %s32, 1
        %s598 = scalar_lea.vmem %s1, %s597
        %p599 = scmp.lt.s32.totalorder %s32, 1
        %s600 = scalar_select %p599, %s32, 1
        %s601 = scalar_lea.vmem %s2, %s600
        %p602 = scmp.lt.s32.totalorder %s32, 1
        %s603 = scalar_select %p602, %s32, 1
        %s604 = smul.addr %s603, 4
        %s605 = smul.addr %s604, 4
        %s606 = scalar_lea.vmem %s3, %s605
        %p607 = scmp.lt.s32.totalorder %s32, 1
        %s608 = scalar_select %p607, %s32, 1
        %s609 = scalar_lea.vmem %s4, %s608
        %p610 = scmp.lt.s32.totalorder %s32, 1
        %s611 = scalar_select %p610, %s32, 1
        %s612 = smul.addr %s611, 4
        %s613 = smul.addr %s612, 4
        %s614 = scalar_lea.vmem %s5, %s613
        %p615 = scmp.lt.s32.totalorder %s32, 1
        %s616 = scalar_select %p615, %s32, 1
        %s617 = scalar_lea.vmem %s6, %s616
        %p618 = scmp.lt.s32.totalorder %s32, 1
        %s619 = scalar_select %p618, %s32, 1
        %s620 = scalar_lea.vmem %s7, %s619
        %p621 = scmp.lt.s32.totalorder %s32, 1
        %s622 = scalar_select %p621, %s32, 1
        %s623 = scalar_lea.vmem %s8, %s622
        %p624 = scmp.lt.s32.totalorder %s32, 1
        %s625 = scalar_select %p624, %s32, 1
        %s626 = smul.addr %s625, 4
        %s627 = smul.addr %s626, 4
        %s628 = scalar_lea.vmem %s9, %s627
        %p629 = scmp.lt.s32.totalorder %s32, 1
        %s630 = scalar_select %p629, %s32, 1
        %s631 = scalar_lea.vmem %s10, %s630
        %p632 = scmp.lt.s32.totalorder %s32, 1
        %s633 = scalar_select %p632, %s32, 1
        %s634 = smul.addr %s633, 16
        %s635 = smul.addr %s634, 4
        %s636 = scalar_lea.vmem %s11, %s635
        %p637 = scmp.lt.s32.totalorder %s32, 1
        %s638 = scalar_select %p637, %s32, 1
        %s639 = scalar_lea.vmem %s12, %s638
        %p641 = scmp.eq.s32.totalorder %s32, 0
        // Predicated region
        $region73: #{tpu_custom_call.1} parent=71 // pred_check
          %p642 = pneg %p641
        $region74: #{tpu_custom_call.1} parent=71 // pred_check_branch
          %644 = sbr.rel (%p642) target = $region76
        $region75: #{tpu_custom_call.1} parent=71 // pred_region
          %v645 = vld [vmem:[%s595] sm:$0xff]
          %vm646 = vcmask 261120
          %647 = vst.msk [vmem:[%s591] sm:$0xff] %vm646, %v645
        $region76: #{tpu_custom_call.1} parent=71 // pred_fallthru
          _
        %v648 = vld [vmem:[%s591] sm:$0xff]
        %v649 = vld [vmem:[%s598] sm:$0x1]
        %v650 = vld [vmem:[%s601] sm:$0x1]
        %vm651 = vcmask 261120
        %v652 = vsel %vm651, %v648, 0.0
        %653 = vadd.xlane.f32.xlu0 %v652
        %v654 = vpop.xlane.xlu0 %653
        %v655 = vrcp.pop 32.0
        %v656 = vmul.f32 %v654, %v655
        %v657 = vsub.f32 %v648, %v656
        %v658 = vmul.f32 %v657, %v657
        %v659 = vsel %vm651, %v658, 0.0
        %660 = vadd.xlane.f32.xlu0 %v659
        %v661 = vpop.xlane.xlu0 %660
        %v662 = vmul.f32 %v661, %v655
        %v663 = vadd.f32 %v662, 1e-05
        %v664 = vrsqrt.pop %v663
        %v665 = vmul.f32 %v657, %v664
        %v667 = vlaneseq
        %v668 = vshrl.u32 %v667, 7
        %v669 = vsub.s32 0, %v668
        %v670 = vrot.slane %v649, %v669
        %v672 = vmul.f32 %v665, %v670
        %v674 = vlaneseq
        %v675 = vshrl.u32 %v674, 7
        %v676 = vsub.s32 0, %v675
        %v677 = vrot.slane %v650, %v676
        %v679 = vadd.f32 %v672, %v677
        %v680 = vpack.c.bf16 %v679, %v679
        %v681 = vld [vmem:[%s606] sm:$0xf]
        %v682 = vld [vmem:[%s606 + $0x4] sm:$0xf]
        %v683 = vld [vmem:[%s606 + $0x8] sm:$0xf]
        %v684 = vld [vmem:[%s606 + $0xc] sm:$0xf]
        %v685 = vld [vmem:[%s609] sm:$0x1]
        %v687 = vlaneseq
        %v688 = vshrl.u32 %v687, 7
        %v689 = vsub.s32 0, %v688
        %v690 = vrot.slane %v685, %v689
        %v696 = vunpack.c.l.b16 %v681
        %v697 = vunpack.c.l.b16 %v682
        %v698 = vunpack.c.l.b16 %v683
        %v699 = vunpack.c.l.b16 %v684
        %v700 = vpack.c.b16 %v697, %v696
        %v701 = vpack.c.b16 %v699, %v698
        %v705 = vsel %vm651, %v680, 0
        %707 = vmatprep.subr.bf16.mxu0 0
        %708 = vmatpush1.bf16.msra.mxu0 %v700
        %709 = vmatprep.subr.bf16.mxu0 0
        %710 = vmatpush1.bf16.msra.mxu0 %v701
        %711 = vmatprep.subr.bf16.mxu0 0
        %712 = vmatpush1.bf16.msra.mxu0 0
        %713 = vmatprep.subr.bf16.mxu0 0
        %714 = vmatpush1.bf16.msra.mxu0 0
        %715 = vmatprep.subr.bf16.mxu0 0
        %716 = vmatpush1.bf16.msra.mxu0 0
        %717 = vmatprep.subr.bf16.mxu0 0
        %718 = vmatpush1.bf16.msra.mxu0 0
        %719 = vmatprep.subr.bf16.mxu0 0
        %720 = vmatpush1.bf16.msra.mxu0 0
        %721 = vmatprep.subr.bf16.mxu0 0
        %722 = vmatpush1.bf16.msra.mxu0 0
        %723 = vmatprep.subr.bf16.mxu0 0
        %724 = vmatpush1.bf16.msra.mxu0 0
        %725 = vmatprep.subr.bf16.mxu0 0
        %726 = vmatpush1.bf16.msra.mxu0 0
        %727 = vmatprep.subr.bf16.mxu0 0
        %728 = vmatpush1.bf16.msra.mxu0 0
        %729 = vmatprep.subr.bf16.mxu0 0
        %730 = vmatpush1.bf16.msra.mxu0 0
        %731 = vmatprep.subr.bf16.mxu0 0
        %732 = vmatpush1.bf16.msra.mxu0 0
        %733 = vmatprep.subr.bf16.mxu0 0
        %734 = vmatpush1.bf16.msra.mxu0 0
        %735 = vmatprep.subr.bf16.mxu0 0
        %736 = vmatpush1.bf16.msra.mxu0 0
        %737 = vmatprep.subr.bf16.mxu0 0
        %738 = vmatpush1.bf16.msra.mxu0 0
        %739 = vmatprep.mubr.bf16.mxu0 0
        %740 = vmatmul.mubr.bf16.gmra.mrb[0].mxu0 %v705
        %v741 = vpop.f32.mrb[0].mxu0
        %v742 = vadd.f32 %v690, %v741
        %v743 = vpop.f32.mrb[0].mxu0
        %v744 = vpop.f32.mrb[0].mxu0
        %v745 = vpop.f32.mrb[0].mxu0
        %746 = vdwg.mxu0
        %v747 = vpack.c.bf16 %v742, %v742
        %749 = vrot.lane.b32.xlu0 %v747, 120
        %v750 = vpop.permute.xlu0 %749
        %751 = vrot.lane.b32.xlu0 %v747, 112
        %v752 = vpop.permute.xlu0 %751
        %753 = vrot.lane.b32.xlu0 %v747, 104
        %v754 = vpop.permute.xlu0 %753
        %v756 = vunpack.c.l.s4 1983009808
        %v757 = vunpack.c.0.s8 %v756
        %v758 = vlaneseq
        %v759 = vshrl.u32 %v758, 7
        %v760 = vsub.s32 %v757, %v759
        %v761 = vrot.slane %v747, %v760
        %v764 = vunpack.c.l.s4 1983009808
        %v765 = vunpack.c.0.s8 %v764
        %v766 = vlaneseq
        %v767 = vshrl.u32 %v766, 7
        %v768 = vsub.s32 %v765, %v767
        %v769 = vrot.slane %v752, %v768
        %v770 = vcombine.low %v761, %v769
        %v771 = vcombine.high %v761, %v769
        %v773 = vunpack.c.l.s4 1934713408
        %v774 = vunpack.c.0.s8 %v773
        %v775 = vlaneseq
        %v776 = vshrl.u32 %v775, 7
        %v777 = vsub.s32 %v774, %v776
        %v778 = vrot.slane %v770, %v777
        %v780 = vunpack.c.l.s4 1934713408
        %v781 = vunpack.c.0.s8 %v780
        %v782 = vlaneseq
        %v783 = vshrl.u32 %v782, 7
        %v784 = vsub.s32 %v781, %v783
        %v785 = vrot.slane %v771, %v784
        %v786 = vcombine.high %v778, 0
        %v787 = vcombine.high %v785, 0
        %v790 = vunpack.c.l.s4 1983009808
        %v791 = vunpack.c.0.s8 %v790
        %v792 = vlaneseq
        %v793 = vshrl.u32 %v792, 7
        %v794 = vsub.s32 %v791, %v793
        %v795 = vrot.slane %v750, %v794
        %v798 = vunpack.c.l.s4 1983009808
        %v799 = vunpack.c.0.s8 %v798
        %v800 = vlaneseq
        %v801 = vshrl.u32 %v800, 7
        %v802 = vsub.s32 %v799, %v801
        %v803 = vrot.slane %v754, %v802
        %v804 = vcombine.low %v795, %v803
        %v805 = vcombine.high %v795, %v803
        %v807 = vunpack.c.l.s4 1934713408
        %v808 = vunpack.c.0.s8 %v807
        %v809 = vlaneseq
        %v810 = vshrl.u32 %v809, 7
        %v811 = vsub.s32 %v808, %v810
        %v812 = vrot.slane %v804, %v811
        %v814 = vunpack.c.l.s4 1934713408
        %v815 = vunpack.c.0.s8 %v814
        %v816 = vlaneseq
        %v817 = vshrl.u32 %v816, 7
        %v818 = vsub.s32 %v815, %v817
        %v819 = vrot.slane %v805, %v818
        %v820 = vcombine.high %v812, 0
        %v821 = vcombine.high %v819, 0
        %v824 = vpack.i.b16 %v812, %v778
        %v826 = vshrl.u32 %v778, 16
        %v827 = vshrl.u32 %v812, 16
        %v828 = vpack.i.b16 %v827, %v826
        %v832 = vpack.i.b16 %v820, %v786
        %v834 = vshrl.u32 %v786, 16
        %v835 = vshrl.u32 %v820, 16
        %v836 = vpack.i.b16 %v835, %v834
        %v840 = vpack.i.b16 %v819, %v785
        %v842 = vshrl.u32 %v785, 16
        %v843 = vshrl.u32 %v819, 16
        %v844 = vpack.i.b16 %v843, %v842
        %v848 = vpack.i.b16 %v821, %v787
        %v850 = vshrl.u32 %v787, 16
        %v851 = vshrl.u32 %v821, 16
        %v852 = vpack.i.b16 %v851, %v850
        %v854 = vcombine.low %v824, %v840
        %v856 = vunpack.c.l.s4 1983009808
        %v857 = vunpack.c.0.s8 %v856
        %v858 = vlaneseq
        %v859 = vshrl.u32 %v858, 7
        %v860 = vsub.s32 %v857, %v859
        %v861 = vrot.slane %v854, %v860
        %v862 = vcombine.low %v832, %v848
        %v864 = vunpack.c.l.s4 1983009808
        %v865 = vunpack.c.0.s8 %v864
        %v866 = vlaneseq
        %v867 = vshrl.u32 %v866, 7
        %v868 = vsub.s32 %v865, %v867
        %v869 = vrot.slane %v862, %v868
        %v870 = vcombine.low %v861, %v869
        %v872 = vunpack.c.l.s4 1934713408
        %v873 = vunpack.c.0.s8 %v872
        %v874 = vlaneseq
        %v875 = vshrl.u32 %v874, 7
        %v876 = vsub.s32 %v873, %v875
        %v877 = vrot.slane %v870, %v876
        %v878 = vcombine.high %v877, 0
        %v879 = vcombine.low %v828, %v844
        %v881 = vunpack.c.l.s4 1983009808
        %v882 = vunpack.c.0.s8 %v881
        %v883 = vlaneseq
        %v884 = vshrl.u32 %v883, 7
        %v885 = vsub.s32 %v882, %v884
        %v886 = vrot.slane %v879, %v885
        %v887 = vcombine.low %v836, %v852
        %v889 = vunpack.c.l.s4 1983009808
        %v890 = vunpack.c.0.s8 %v889
        %v891 = vlaneseq
        %v892 = vshrl.u32 %v891, 7
        %v893 = vsub.s32 %v890, %v892
        %v894 = vrot.slane %v887, %v893
        %v895 = vcombine.low %v886, %v894
        %v897 = vunpack.c.l.s4 1934713408
        %v898 = vunpack.c.0.s8 %v897
        %v899 = vlaneseq
        %v900 = vshrl.u32 %v899, 7
        %v901 = vsub.s32 %v898, %v900
        %v902 = vrot.slane %v895, %v901
        %v903 = vcombine.high %v902, 0
        %v906 = vpack.i.b16 %v902, %v877
        %v907 = vshrl.u32 %v877, 16
        %v908 = vshrl.u32 %v902, 16
        %v909 = vpack.i.b16 %v908, %v907
        %v912 = vpack.i.b16 %v903, %v878
        %v913 = vshrl.u32 %v878, 16
        %v914 = vshrl.u32 %v903, 16
        %v915 = vpack.i.b16 %v914, %v913
        %916 = vrot.lane.b32.xlu0 %v747, 96
        %v917 = vpop.permute.xlu0 %916
        %918 = vrot.lane.b32.xlu0 %v750, 96
        %v919 = vpop.permute.xlu0 %918
        %920 = vrot.lane.b32.xlu0 %v752, 96
        %v921 = vpop.permute.xlu0 %920
        %922 = vrot.lane.b32.xlu0 %v754, 96
        %v923 = vpop.permute.xlu0 %922
        %v926 = vunpack.c.l.s4 1983009808
        %v927 = vunpack.c.0.s8 %v926
        %v928 = vlaneseq
        %v929 = vshrl.u32 %v928, 7
        %v930 = vsub.s32 %v927, %v929
        %v931 = vrot.slane %v917, %v930
        %v934 = vunpack.c.l.s4 1983009808
        %v935 = vunpack.c.0.s8 %v934
        %v936 = vlaneseq
        %v937 = vshrl.u32 %v936, 7
        %v938 = vsub.s32 %v935, %v937
        %v939 = vrot.slane %v921, %v938
        %v940 = vcombine.low %v931, %v939
        %v941 = vcombine.high %v931, %v939
        %v943 = vunpack.c.l.s4 1934713408
        %v944 = vunpack.c.0.s8 %v943
        %v945 = vlaneseq
        %v946 = vshrl.u32 %v945, 7
        %v947 = vsub.s32 %v944, %v946
        %v948 = vrot.slane %v940, %v947
        %v950 = vunpack.c.l.s4 1934713408
        %v951 = vunpack.c.0.s8 %v950
        %v952 = vlaneseq
        %v953 = vshrl.u32 %v952, 7
        %v954 = vsub.s32 %v951, %v953
        %v955 = vrot.slane %v941, %v954
        %v956 = vcombine.high %v948, 0
        %v957 = vcombine.high %v955, 0
        %v960 = vunpack.c.l.s4 1983009808
        %v961 = vunpack.c.0.s8 %v960
        %v962 = vlaneseq
        %v963 = vshrl.u32 %v962, 7
        %v964 = vsub.s32 %v961, %v963
        %v965 = vrot.slane %v919, %v964
        %v968 = vunpack.c.l.s4 1983009808
        %v969 = vunpack.c.0.s8 %v968
        %v970 = vlaneseq
        %v971 = vshrl.u32 %v970, 7
        %v972 = vsub.s32 %v969, %v971
        %v973 = vrot.slane %v923, %v972
        %v974 = vcombine.low %v965, %v973
        %v975 = vcombine.high %v965, %v973
        %v977 = vunpack.c.l.s4 1934713408
        %v978 = vunpack.c.0.s8 %v977
        %v979 = vlaneseq
        %v980 = vshrl.u32 %v979, 7
        %v981 = vsub.s32 %v978, %v980
        %v982 = vrot.slane %v974, %v981
        %v984 = vunpack.c.l.s4 1934713408
        %v985 = vunpack.c.0.s8 %v984
        %v986 = vlaneseq
        %v987 = vshrl.u32 %v986, 7
        %v988 = vsub.s32 %v985, %v987
        %v989 = vrot.slane %v975, %v988
        %v990 = vcombine.high %v982, 0
        %v991 = vcombine.high %v989, 0
        %v994 = vpack.i.b16 %v982, %v948
        %v996 = vshrl.u32 %v948, 16
        %v997 = vshrl.u32 %v982, 16
        %v998 = vpack.i.b16 %v997, %v996
        %v1002 = vpack.i.b16 %v990, %v956
        %v1004 = vshrl.u32 %v956, 16
        %v1005 = vshrl.u32 %v990, 16
        %v1006 = vpack.i.b16 %v1005, %v1004
        %v1010 = vpack.i.b16 %v989, %v955
        %v1012 = vshrl.u32 %v955, 16
        %v1013 = vshrl.u32 %v989, 16
        %v1014 = vpack.i.b16 %v1013, %v1012
        %v1018 = vpack.i.b16 %v991, %v957
        %v1020 = vshrl.u32 %v957, 16
        %v1021 = vshrl.u32 %v991, 16
        %v1022 = vpack.i.b16 %v1021, %v1020
        %1024 = vxpose.xlu0.c.b16.start [1/8] %v994, 128
        %1025 = vxpose.xlu0.c.b16.cont [2/8] 0, 128
        %1026 = vxpose.xlu0.c.b16.cont [3/8] 0, 128
        %1027 = vxpose.xlu0.c.b16.cont [4/8] 0, 128
        %1028 = vxpose.xlu0.c.b16.cont [5/8] 0, 128
        %1029 = vxpose.xlu0.c.b16.cont [6/8] 0, 128
        %1030 = vxpose.xlu0.c.b16.cont [7/8] 0, 128
        %1031 = vxpose.xlu0.c.b16.end [8/8] 0, 128
        %v1032 = vpop.trf.xlu0
        %v1033 = vpop.trf.xlu0
        %v1034 = vpop.trf.xlu0
        %v1035 = vpop.trf.xlu0
        %v1036 = vpop.trf.xlu0
        %v1037 = vpop.trf.xlu0
        %v1038 = vpop.trf.xlu0
        %v1039 = vpop.trf.xlu0
        %1040 = vxpose.xlu0.c.b16.start [1/8] %v998, 128
        %1041 = vxpose.xlu0.c.b16.cont [2/8] 0, 128
        %1042 = vxpose.xlu0.c.b16.cont [3/8] 0, 128
        %1043 = vxpose.xlu0.c.b16.cont [4/8] 0, 128
        %1044 = vxpose.xlu0.c.b16.cont [5/8] 0, 128
        %1045 = vxpose.xlu0.c.b16.cont [6/8] 0, 128
        %1046 = vxpose.xlu0.c.b16.cont [7/8] 0, 128
        %1047 = vxpose.xlu0.c.b16.end [8/8] 0, 128
        %v1048 = vpop.trf.xlu0
        %v1049 = vpop.trf.xlu0
        %v1050 = vpop.trf.xlu0
        %v1051 = vpop.trf.xlu0
        %v1052 = vpop.trf.xlu0
        %v1053 = vpop.trf.xlu0
        %v1054 = vpop.trf.xlu0
        %v1055 = vpop.trf.xlu0
        %1056 = vxpose.xlu0.c.b16.start [1/8] %v1002, 128
        %1057 = vxpose.xlu0.c.b16.cont [2/8] 0, 128
        %1058 = vxpose.xlu0.c.b16.cont [3/8] 0, 128
        %1059 = vxpose.xlu0.c.b16.cont [4/8] 0, 128
        %1060 = vxpose.xlu0.c.b16.cont [5/8] 0, 128
        %1061 = vxpose.xlu0.c.b16.cont [6/8] 0, 128
        %1062 = vxpose.xlu0.c.b16.cont [7/8] 0, 128
        %1063 = vxpose.xlu0.c.b16.end [8/8] 0, 128
        %v1064 = vpop.trf.xlu0
        %v1065 = vpop.trf.xlu0
        %v1066 = vpop.trf.xlu0
        %v1067 = vpop.trf.xlu0
        %v1068 = vpop.trf.xlu0
        %v1069 = vpop.trf.xlu0
        %v1070 = vpop.trf.xlu0
        %v1071 = vpop.trf.xlu0
        %1072 = vxpose.xlu0.c.b16.start [1/8] %v1006, 128
        %1073 = vxpose.xlu0.c.b16.cont [2/8] 0, 128
        %1074 = vxpose.xlu0.c.b16.cont [3/8] 0, 128
        %1075 = vxpose.xlu0.c.b16.cont [4/8] 0, 128
        %1076 = vxpose.xlu0.c.b16.cont [5/8] 0, 128
        %1077 = vxpose.xlu0.c.b16.cont [6/8] 0, 128
        %1078 = vxpose.xlu0.c.b16.cont [7/8] 0, 128
        %1079 = vxpose.xlu0.c.b16.end [8/8] 0, 128
        %v1080 = vpop.trf.xlu0
        %v1081 = vpop.trf.xlu0
        %v1082 = vpop.trf.xlu0
        %v1083 = vpop.trf.xlu0
        %v1084 = vpop.trf.xlu0
        %v1085 = vpop.trf.xlu0
        %v1086 = vpop.trf.xlu0
        %v1087 = vpop.trf.xlu0
        %1088 = vxpose.xlu0.c.b16.start [1/8] %v1010, 128
        %1089 = vxpose.xlu0.c.b16.cont [2/8] 0, 128
        %1090 = vxpose.xlu0.c.b16.cont [3/8] 0, 128
        %1091 = vxpose.xlu0.c.b16.cont [4/8] 0, 128
        %1092 = vxpose.xlu0.c.b16.cont [5/8] 0, 128
        %1093 = vxpose.xlu0.c.b16.cont [6/8] 0, 128
        %1094 = vxpose.xlu0.c.b16.cont [7/8] 0, 128
        %1095 = vxpose.xlu0.c.b16.end [8/8] 0, 128
        %v1096 = vpop.trf.xlu0
        %v1097 = vpop.trf.xlu0
        %v1098 = vpop.trf.xlu0
        %v1099 = vpop.trf.xlu0
        %v1100 = vpop.trf.xlu0
        %v1101 = vpop.trf.xlu0
        %v1102 = vpop.trf.xlu0
        %v1103 = vpop.trf.xlu0
        %1104 = vxpose.xlu0.c.b16.start [1/8] %v1014, 128
        %1105 = vxpose.xlu0.c.b16.cont [2/8] 0, 128
        %1106 = vxpose.xlu0.c.b16.cont [3/8] 0, 128
        %1107 = vxpose.xlu0.c.b16.cont [4/8] 0, 128
        %1108 = vxpose.xlu0.c.b16.cont [5/8] 0, 128
        %1109 = vxpose.xlu0.c.b16.cont [6/8] 0, 128
        %1110 = vxpose.xlu0.c.b16.cont [7/8] 0, 128
        %1111 = vxpose.xlu0.c.b16.end [8/8] 0, 128
        %v1112 = vpop.trf.xlu0
        %v1113 = vpop.trf.xlu0
        %v1114 = vpop.trf.xlu0
        %v1115 = vpop.trf.xlu0
        %v1116 = vpop.trf.xlu0
        %v1117 = vpop.trf.xlu0
        %v1118 = vpop.trf.xlu0
        %v1119 = vpop.trf.xlu0
        %1120 = vxpose.xlu0.c.b16.start [1/8] %v1018, 128
        %1121 = vxpose.xlu0.c.b16.cont [2/8] 0, 128
        %1122 = vxpose.xlu0.c.b16.cont [3/8] 0, 128
        %1123 = vxpose.xlu0.c.b16.cont [4/8] 0, 128
        %1124 = vxpose.xlu0.c.b16.cont [5/8] 0, 128
        %1125 = vxpose.xlu0.c.b16.cont [6/8] 0, 128
        %1126 = vxpose.xlu0.c.b16.cont [7/8] 0, 128
        %1127 = vxpose.xlu0.c.b16.end [8/8] 0, 128
        %v1128 = vpop.trf.xlu0
        %v1129 = vpop.trf.xlu0
        %v1130 = vpop.trf.xlu0
        %v1131 = vpop.trf.xlu0
        %v1132 = vpop.trf.xlu0
        %v1133 = vpop.trf.xlu0
        %v1134 = vpop.trf.xlu0
        %v1135 = vpop.trf.xlu0
        %1136 = vxpose.xlu0.c.b16.start [1/8] %v1022, 128
        %1137 = vxpose.xlu0.c.b16.cont [2/8] 0, 128
        %1138 = vxpose.xlu0.c.b16.cont [3/8] 0, 128
        %1139 = vxpose.xlu0.c.b16.cont [4/8] 0, 128
        %1140 = vxpose.xlu0.c.b16.cont [5/8] 0, 128
        %1141 = vxpose.xlu0.c.b16.cont [6/8] 0, 128
        %1142 = vxpose.xlu0.c.b16.cont [7/8] 0, 128
        %1143 = vxpose.xlu0.c.b16.end [8/8] 0, 128
        %v1144 = vpop.trf.xlu0
        %v1145 = vpop.trf.xlu0
        %v1146 = vpop.trf.xlu0
        %v1147 = vpop.trf.xlu0
        %v1148 = vpop.trf.xlu0
        %v1149 = vpop.trf.xlu0
        %v1150 = vpop.trf.xlu0
        %v1151 = vpop.trf.xlu0
        %v1152 = vcombine.low %v1032, %v1096
        %v1154 = vunpack.c.l.s4 1983009808
        %v1155 = vunpack.c.0.s8 %v1154
        %v1156 = vlaneseq
        %v1157 = vshrl.u32 %v1156, 7
        %v1158 = vsub.s32 %v1155, %v1157
        %v1159 = vrot.slane %v1152, %v1158
        %v1160 = vcombine.low %v1064, %v1128
        %v1162 = vunpack.c.l.s4 1983009808
        %v1163 = vunpack.c.0.s8 %v1162
        %v1164 = vlaneseq
        %v1165 = vshrl.u32 %v1164, 7
        %v1166 = vsub.s32 %v1163, %v1165
        %v1167 = vrot.slane %v1160, %v1166
        %v1168 = vcombine.low %v1159, %v1167
        %v1169 = vcombine.high %v1159, %v1167
        %v1171 = vunpack.c.l.s4 1934713408
        %v1172 = vunpack.c.0.s8 %v1171
        %v1173 = vlaneseq
        %v1174 = vshrl.u32 %v1173, 7
        %v1175 = vsub.s32 %v1172, %v1174
        %v1176 = vrot.slane %v1168, %v1175
        %v1178 = vunpack.c.l.s4 1934713408
        %v1179 = vunpack.c.0.s8 %v1178
        %v1180 = vlaneseq
        %v1181 = vshrl.u32 %v1180, 7
        %v1182 = vsub.s32 %v1179, %v1181
        %v1183 = vrot.slane %v1169, %v1182
        %v1184 = vcombine.high %v1176, 0
        %v1185 = vcombine.high %v1183, 0
        %v1186 = vcombine.low %v1048, %v1112
        %v1188 = vunpack.c.l.s4 1983009808
        %v1189 = vunpack.c.0.s8 %v1188
        %v1190 = vlaneseq
        %v1191 = vshrl.u32 %v1190, 7
        %v1192 = vsub.s32 %v1189, %v1191
        %v1193 = vrot.slane %v1186, %v1192
        %v1194 = vcombine.low %v1080, %v1144
        %v1196 = vunpack.c.l.s4 1983009808
        %v1197 = vunpack.c.0.s8 %v1196
        %v1198 = vlaneseq
        %v1199 = vshrl.u32 %v1198, 7
        %v1200 = vsub.s32 %v1197, %v1199
        %v1201 = vrot.slane %v1194, %v1200
        %v1202 = vcombine.low %v1193, %v1201
        %v1203 = vcombine.high %v1193, %v1201
        %v1205 = vunpack.c.l.s4 1934713408
        %v1206 = vunpack.c.0.s8 %v1205
        %v1207 = vlaneseq
        %v1208 = vshrl.u32 %v1207, 7
        %v1209 = vsub.s32 %v1206, %v1208
        %v1210 = vrot.slane %v1202, %v1209
        %v1212 = vunpack.c.l.s4 1934713408
        %v1213 = vunpack.c.0.s8 %v1212
        %v1214 = vlaneseq
        %v1215 = vshrl.u32 %v1214, 7
        %v1216 = vsub.s32 %v1213, %v1215
        %v1217 = vrot.slane %v1203, %v1216
        %v1218 = vcombine.high %v1210, 0
        %v1219 = vcombine.high %v1217, 0
        %v1222 = vpack.i.b16 %v1210, %v1176
        %v1224 = vshrl.u32 %v1176, 16
        %v1225 = vshrl.u32 %v1210, 16
        %v1226 = vpack.i.b16 %v1225, %v1224
        %v1230 = vpack.i.b16 %v1218, %v1184
        %v1232 = vshrl.u32 %v1184, 16
        %v1233 = vshrl.u32 %v1218, 16
        %v1234 = vpack.i.b16 %v1233, %v1232
        %v1238 = vpack.i.b16 %v1217, %v1183
        %v1240 = vshrl.u32 %v1183, 16
        %v1241 = vshrl.u32 %v1217, 16
        %v1242 = vpack.i.b16 %v1241, %v1240
        %v1246 = vpack.i.b16 %v1219, %v1185
        %v1248 = vshrl.u32 %v1185, 16
        %v1249 = vshrl.u32 %v1219, 16
        %v1250 = vpack.i.b16 %v1249, %v1248
        %1252 = vxpose.xlu0.c.b16.start [1/8] %v1222, 128
        %1253 = vxpose.xlu0.c.b16.cont [2/8] 0, 128
        %1254 = vxpose.xlu0.c.b16.cont [3/8] 0, 128
        %1255 = vxpose.xlu0.c.b16.cont [4/8] 0, 128
        %1256 = vxpose.xlu0.c.b16.cont [5/8] 0, 128
        %1257 = vxpose.xlu0.c.b16.cont [6/8] 0, 128
        %1258 = vxpose.xlu0.c.b16.cont [7/8] 0, 128
        %1259 = vxpose.xlu0.c.b16.end [8/8] 0, 128
        %v1260 = vpop.trf.xlu0
        %v1261 = vpop.trf.xlu0
        %v1262 = vpop.trf.xlu0
        %v1263 = vpop.trf.xlu0
        %v1264 = vpop.trf.xlu0
        %v1265 = vpop.trf.xlu0
        %v1266 = vpop.trf.xlu0
        %v1267 = vpop.trf.xlu0
        %1268 = vxpose.xlu0.c.b16.start [1/8] %v1226, 128
        %1269 = vxpose.xlu0.c.b16.cont [2/8] 0, 128
        %1270 = vxpose.xlu0.c.b16.cont [3/8] 0, 128
        %1271 = vxpose.xlu0.c.b16.cont [4/8] 0, 128
        %1272 = vxpose.xlu0.c.b16.cont [5/8] 0, 128
        %1273 = vxpose.xlu0.c.b16.cont [6/8] 0, 128
        %1274 = vxpose.xlu0.c.b16.cont [7/8] 0, 128
        %1275 = vxpose.xlu0.c.b16.end [8/8] 0, 128
        %v1276 = vpop.trf.xlu0
        %v1277 = vpop.trf.xlu0
        %v1278 = vpop.trf.xlu0
        %v1279 = vpop.trf.xlu0
        %v1280 = vpop.trf.xlu0
        %v1281 = vpop.trf.xlu0
        %v1282 = vpop.trf.xlu0
        %v1283 = vpop.trf.xlu0
        %1284 = vxpose.xlu0.c.b16.start [1/8] %v1230, 128
        %1285 = vxpose.xlu0.c.b16.cont [2/8] 0, 128
        %1286 = vxpose.xlu0.c.b16.cont [3/8] 0, 128
        %1287 = vxpose.xlu0.c.b16.cont [4/8] 0, 128
        %1288 = vxpose.xlu0.c.b16.cont [5/8] 0, 128
        %1289 = vxpose.xlu0.c.b16.cont [6/8] 0, 128
        %1290 = vxpose.xlu0.c.b16.cont [7/8] 0, 128
        %1291 = vxpose.xlu0.c.b16.end [8/8] 0, 128
        %v1292 = vpop.trf.xlu0
        %v1293 = vpop.trf.xlu0
        %v1294 = vpop.trf.xlu0
        %v1295 = vpop.trf.xlu0
        %v1296 = vpop.trf.xlu0
        %v1297 = vpop.trf.xlu0
        %v1298 = vpop.trf.xlu0
        %v1299 = vpop.trf.xlu0
        %1300 = vxpose.xlu0.c.b16.start [1/8] %v1234, 128
        %1301 = vxpose.xlu0.c.b16.cont [2/8] 0, 128
        %1302 = vxpose.xlu0.c.b16.cont [3/8] 0, 128
        %1303 = vxpose.xlu0.c.b16.cont [4/8] 0, 128
        %1304 = vxpose.xlu0.c.b16.cont [5/8] 0, 128
        %1305 = vxpose.xlu0.c.b16.cont [6/8] 0, 128
        %1306 = vxpose.xlu0.c.b16.cont [7/8] 0, 128
        %1307 = vxpose.xlu0.c.b16.end [8/8] 0, 128
        %v1308 = vpop.trf.xlu0
        %v1309 = vpop.trf.xlu0
        %v1310 = vpop.trf.xlu0
        %v1311 = vpop.trf.xlu0
        %v1312 = vpop.trf.xlu0
        %v1313 = vpop.trf.xlu0
        %v1314 = vpop.trf.xlu0
        %v1315 = vpop.trf.xlu0
        %1316 = vxpose.xlu0.c.b16.start [1/8] %v1238, 128
        %1317 = vxpose.xlu0.c.b16.cont [2/8] 0, 128
        %1318 = vxpose.xlu0.c.b16.cont [3/8] 0, 128
        %1319 = vxpose.xlu0.c.b16.cont [4/8] 0, 128
        %1320 = vxpose.xlu0.c.b16.cont [5/8] 0, 128
        %1321 = vxpose.xlu0.c.b16.cont [6/8] 0, 128
        %1322 = vxpose.xlu0.c.b16.cont [7/8] 0, 128
        %1323 = vxpose.xlu0.c.b16.end [8/8] 0, 128
        %v1324 = vpop.trf.xlu0
        %v1325 = vpop.trf.xlu0
        %v1326 = vpop.trf.xlu0
        %v1327 = vpop.trf.xlu0
        %v1328 = vpop.trf.xlu0
        %v1329 = vpop.trf.xlu0
        %v1330 = vpop.trf.xlu0
        %v1331 = vpop.trf.xlu0
        %1332 = vxpose.xlu0.c.b16.start [1/8] %v1242, 128
        %1333 = vxpose.xlu0.c.b16.cont [2/8] 0, 128
        %1334 = vxpose.xlu0.c.b16.cont [3/8] 0, 128
        %1335 = vxpose.xlu0.c.b16.cont [4/8] 0, 128
        %1336 = vxpose.xlu0.c.b16.cont [5/8] 0, 128
        %1337 = vxpose.xlu0.c.b16.cont [6/8] 0, 128
        %1338 = vxpose.xlu0.c.b16.cont [7/8] 0, 128
        %1339 = vxpose.xlu0.c.b16.end [8/8] 0, 128
        %v1340 = vpop.trf.xlu0
        %v1341 = vpop.trf.xlu0
        %v1342 = vpop.trf.xlu0
        %v1343 = vpop.trf.xlu0
        %v1344 = vpop.trf.xlu0
        %v1345 = vpop.trf.xlu0
        %v1346 = vpop.trf.xlu0
        %v1347 = vpop.trf.xlu0
        %1348 = vxpose.xlu0.c.b16.start [1/8] %v1246, 128
        %1349 = vxpose.xlu0.c.b16.cont [2/8] 0, 128
        %1350 = vxpose.xlu0.c.b16.cont [3/8] 0, 128
        %1351 = vxpose.xlu0.c.b16.cont [4/8] 0, 128
        %1352 = vxpose.xlu0.c.b16.cont [5/8] 0, 128
        %1353 = vxpose.xlu0.c.b16.cont [6/8] 0, 128
        %1354 = vxpose.xlu0.c.b16.cont [7/8] 0, 128
        %1355 = vxpose.xlu0.c.b16.end [8/8] 0, 128
        %v1356 = vpop.trf.xlu0
        %v1357 = vpop.trf.xlu0
        %v1358 = vpop.trf.xlu0
        %v1359 = vpop.trf.xlu0
        %v1360 = vpop.trf.xlu0
        %v1361 = vpop.trf.xlu0
        %v1362 = vpop.trf.xlu0
        %v1363 = vpop.trf.xlu0
        %1364 = vxpose.xlu0.c.b16.start [1/8] %v1250, 128
        %1365 = vxpose.xlu0.c.b16.cont [2/8] 0, 128
        %1366 = vxpose.xlu0.c.b16.cont [3/8] 0, 128
        %1367 = vxpose.xlu0.c.b16.cont [4/8] 0, 128
        %1368 = vxpose.xlu0.c.b16.cont [5/8] 0, 128
        %1369 = vxpose.xlu0.c.b16.cont [6/8] 0, 128
        %1370 = vxpose.xlu0.c.b16.cont [7/8] 0, 128
        %1371 = vxpose.xlu0.c.b16.end [8/8] 0, 128
        %v1372 = vpop.trf.xlu0
        %v1373 = vpop.trf.xlu0
        %v1374 = vpop.trf.xlu0
        %v1375 = vpop.trf.xlu0
        %v1376 = vpop.trf.xlu0
        %v1377 = vpop.trf.xlu0
        %v1378 = vpop.trf.xlu0
        %v1379 = vpop.trf.xlu0
        %v1380 = vcombine.low %v1260, %v1324
        %v1382 = vunpack.c.l.s4 1983009808
        %v1383 = vunpack.c.0.s8 %v1382
        %v1384 = vlaneseq
        %v1385 = vshrl.u32 %v1384, 7
        %v1386 = vsub.s32 %v1383, %v1385
        %v1387 = vrot.slane %v1380, %v1386
        %v1388 = vcombine.low %v1292, %v1356
        %v1390 = vunpack.c.l.s4 1983009808
        %v1391 = vunpack.c.0.s8 %v1390
        %v1392 = vlaneseq
        %v1393 = vshrl.u32 %v1392, 7
        %v1394 = vsub.s32 %v1391, %v1393
        %v1395 = vrot.slane %v1388, %v1394
        %v1396 = vcombine.low %v1387, %v1395
        %v1398 = vunpack.c.l.s4 1934713408
        %v1399 = vunpack.c.0.s8 %v1398
        %v1400 = vlaneseq
        %v1401 = vshrl.u32 %v1400, 7
        %v1402 = vsub.s32 %v1399, %v1401
        %v1403 = vrot.slane %v1396, %v1402
        %v1404 = vcombine.high %v1403, 0
        %v1405 = vcombine.low %v1276, %v1340
        %v1407 = vunpack.c.l.s4 1983009808
        %v1408 = vunpack.c.0.s8 %v1407
        %v1409 = vlaneseq
        %v1410 = vshrl.u32 %v1409, 7
        %v1411 = vsub.s32 %v1408, %v1410
        %v1412 = vrot.slane %v1405, %v1411
        %v1413 = vcombine.low %v1308, %v1372
        %v1415 = vunpack.c.l.s4 1983009808
        %v1416 = vunpack.c.0.s8 %v1415
        %v1417 = vlaneseq
        %v1418 = vshrl.u32 %v1417, 7
        %v1419 = vsub.s32 %v1416, %v1418
        %v1420 = vrot.slane %v1413, %v1419
        %v1421 = vcombine.low %v1412, %v1420
        %v1423 = vunpack.c.l.s4 1934713408
        %v1424 = vunpack.c.0.s8 %v1423
        %v1425 = vlaneseq
        %v1426 = vshrl.u32 %v1425, 7
        %v1427 = vsub.s32 %v1424, %v1426
        %v1428 = vrot.slane %v1421, %v1427
        %v1429 = vcombine.high %v1428, 0
        %v1432 = vpack.i.b16 %v1428, %v1403
        %v1433 = vshrl.u32 %v1403, 16
        %v1434 = vshrl.u32 %v1428, 16
        %v1435 = vpack.i.b16 %v1434, %v1433
        %v1438 = vpack.i.b16 %v1429, %v1404
        %v1439 = vshrl.u32 %v1404, 16
        %v1440 = vshrl.u32 %v1429, 16
        %v1441 = vpack.i.b16 %v1440, %v1439
        %1442 = vrot.lane.b32.xlu0 %v747, 64
        %v1443 = vpop.permute.xlu0 %1442
        %1444 = vrot.lane.b32.xlu0 %v750, 64
        %v1445 = vpop.permute.xlu0 %1444
        %1446 = vrot.lane.b32.xlu0 %v752, 64
        %v1447 = vpop.permute.xlu0 %1446
        %1448 = vrot.lane.b32.xlu0 %v754, 64
        %v1449 = vpop.permute.xlu0 %1448
        %v1452 = vunpack.c.l.s4 1983009808
        %v1453 = vunpack.c.0.s8 %v1452
        %v1454 = vlaneseq
        %v1455 = vshrl.u32 %v1454, 7
        %v1456 = vsub.s32 %v1453, %v1455
        %v1457 = vrot.slane %v1443, %v1456
        %v1460 = vunpack.c.l.s4 1983009808
        %v1461 = vunpack.c.0.s8 %v1460
        %v1462 = vlaneseq
        %v1463 = vshrl.u32 %v1462, 7
        %v1464 = vsub.s32 %v1461, %v1463
        %v1465 = vrot.slane %v1447, %v1464
        %v1466 = vcombine.low %v1457, %v1465
        %v1467 = vcombine.high %v1457, %v1465
        %v1469 = vunpack.c.l.s4 1934713408
        %v1470 = vunpack.c.0.s8 %v1469
        %v1471 = vlaneseq
        %v1472 = vshrl.u32 %v1471, 7
        %v1473 = vsub.s32 %v1470, %v1472
        %v1474 = vrot.slane %v1466, %v1473
        %v1476 = vunpack.c.l.s4 1934713408
        %v1477 = vunpack.c.0.s8 %v1476
        %v1478 = vlaneseq
        %v1479 = vshrl.u32 %v1478, 7
        %v1480 = vsub.s32 %v1477, %v1479
        %v1481 = vrot.slane %v1467, %v1480
        %v1482 = vcombine.high %v1474, 0
        %v1483 = vcombine.high %v1481, 0
        %v1486 = vunpack.c.l.s4 1983009808
        %v1487 = vunpack.c.0.s8 %v1486
        %v1488 = vlaneseq
        %v1489 = vshrl.u32 %v1488, 7
        %v1490 = vsub.s32 %v1487, %v1489
        %v1491 = vrot.slane %v1445, %v1490
        %v1494 = vunpack.c.l.s4 1983009808
        %v1495 = vunpack.c.0.s8 %v1494
        %v1496 = vlaneseq
        %v1497 = vshrl.u32 %v1496, 7
        %v1498 = vsub.s32 %v1495, %v1497
        %v1499 = vrot.slane %v1449, %v1498
        %v1500 = vcombine.low %v1491, %v1499
        %v1501 = vcombine.high %v1491, %v1499
        %v1503 = vunpack.c.l.s4 1934713408
        %v1504 = vunpack.c.0.s8 %v1503
        %v1505 = vlaneseq
        %v1506 = vshrl.u32 %v1505, 7
        %v1507 = vsub.s32 %v1504, %v1506
        %v1508 = vrot.slane %v1500, %v1507
        %v1510 = vunpack.c.l.s4 1934713408
        %v1511 = vunpack.c.0.s8 %v1510
        %v1512 = vlaneseq
        %v1513 = vshrl.u32 %v1512, 7
        %v1514 = vsub.s32 %v1511, %v1513
        %v1515 = vrot.slane %v1501, %v1514
        %v1516 = vcombine.high %v1508, 0
        %v1517 = vcombine.high %v1515, 0
        %v1520 = vpack.i.b16 %v1508, %v1474
        %v1522 = vshrl.u32 %v1474, 16
        %v1523 = vshrl.u32 %v1508, 16
        %v1524 = vpack.i.b16 %v1523, %v1522
        %v1528 = vpack.i.b16 %v1516, %v1482
        %v1530 = vshrl.u32 %v1482, 16
        %v1531 = vshrl.u32 %v1516, 16
        %v1532 = vpack.i.b16 %v1531, %v1530
        %v1536 = vpack.i.b16 %v1515, %v1481
        %v1538 = vshrl.u32 %v1481, 16
        %v1539 = vshrl.u32 %v1515, 16
        %v1540 = vpack.i.b16 %v1539, %v1538
        %v1544 = vpack.i.b16 %v1517, %v1483
        %v1546 = vshrl.u32 %v1483, 16
        %v1547 = vshrl.u32 %v1517, 16
        %v1548 = vpack.i.b16 %v1547, %v1546
        %v1550 = vcombine.low %v1520, %v1536
        %v1552 = vunpack.c.l.s4 1983009808
        %v1553 = vunpack.c.0.s8 %v1552
        %v1554 = vlaneseq
        %v1555 = vshrl.u32 %v1554, 7
        %v1556 = vsub.s32 %v1553, %v1555
        %v1557 = vrot.slane %v1550, %v1556
        %v1558 = vcombine.low %v1528, %v1544
        %v1560 = vunpack.c.l.s4 1983009808
        %v1561 = vunpack.c.0.s8 %v1560
        %v1562 = vlaneseq
        %v1563 = vshrl.u32 %v1562, 7
        %v1564 = vsub.s32 %v1561, %v1563
        %v1565 = vrot.slane %v1558, %v1564
        %v1566 = vcombine.low %v1557, %v1565
        %v1568 = vunpack.c.l.s4 1934713408
        %v1569 = vunpack.c.0.s8 %v1568
        %v1570 = vlaneseq
        %v1571 = vshrl.u32 %v1570, 7
        %v1572 = vsub.s32 %v1569, %v1571
        %v1573 = vrot.slane %v1566, %v1572
        %v1574 = vcombine.high %v1573, 0
        %v1575 = vcombine.low %v1524, %v1540
        %v1577 = vunpack.c.l.s4 1983009808
        %v1578 = vunpack.c.0.s8 %v1577
        %v1579 = vlaneseq
        %v1580 = vshrl.u32 %v1579, 7
        %v1581 = vsub.s32 %v1578, %v1580
        %v1582 = vrot.slane %v1575, %v1581
        %v1583 = vcombine.low %v1532, %v1548
        %v1585 = vunpack.c.l.s4 1983009808
        %v1586 = vunpack.c.0.s8 %v1585
        %v1587 = vlaneseq
        %v1588 = vshrl.u32 %v1587, 7
        %v1589 = vsub.s32 %v1586, %v1588
        %v1590 = vrot.slane %v1583, %v1589
        %v1591 = vcombine.low %v1582, %v1590
        %v1593 = vunpack.c.l.s4 1934713408
        %v1594 = vunpack.c.0.s8 %v1593
        %v1595 = vlaneseq
        %v1596 = vshrl.u32 %v1595, 7
        %v1597 = vsub.s32 %v1594, %v1596
        %v1598 = vrot.slane %v1591, %v1597
        %v1599 = vcombine.high %v1598, 0
        %v1602 = vpack.i.b16 %v1598, %v1573
        %v1603 = vshrl.u32 %v1573, 16
        %v1604 = vshrl.u32 %v1598, 16
        %v1605 = vpack.i.b16 %v1604, %v1603
        %v1608 = vpack.i.b16 %v1599, %v1574
        %v1609 = vshrl.u32 %v1574, 16
        %v1610 = vshrl.u32 %v1599, 16
        %v1611 = vpack.i.b16 %v1610, %v1609
        %vm1612 = vcmask 64512
        %v1614 = vsel %vm1612, %v906, 0
        %vm1616 = vcmask 1043456
        %v1618 = vsel %vm1616, %v1432, 0
        %1620 = vmatprep.subr.bf16.mxu0 0
        %1621 = vmatpush1.bf16.msra.mxu0 %v1618
        %1622 = vmatprep.subr.bf16.mxu0 0
        %1623 = vmatpush1.bf16.msra.mxu0 0
        %1624 = vmatprep.subr.bf16.mxu0 0
        %1625 = vmatpush1.bf16.msra.mxu0 0
        %1626 = vmatprep.subr.bf16.mxu0 0
        %1627 = vmatpush1.bf16.msra.mxu0 0
        %1628 = vmatprep.subr.bf16.mxu0 0
        %1629 = vmatpush1.bf16.msra.mxu0 0
        %1630 = vmatprep.subr.bf16.mxu0 0
        %1631 = vmatpush1.bf16.msra.mxu0 0
        %1632 = vmatprep.subr.bf16.mxu0 0
        %1633 = vmatpush1.bf16.msra.mxu0 0
        %1634 = vmatprep.subr.bf16.mxu0 0
        %1635 = vmatpush1.bf16.msra.mxu0 0
        %1636 = vmatprep.subr.bf16.mxu0 0
        %1637 = vmatpush1.bf16.msra.mxu0 0
        %1638 = vmatprep.subr.bf16.mxu0 0
        %1639 = vmatpush1.bf16.msra.mxu0 0
        %1640 = vmatprep.subr.bf16.mxu0 0
        %1641 = vmatpush1.bf16.msra.mxu0 0
        %1642 = vmatprep.subr.bf16.mxu0 0
        %1643 = vmatpush1.bf16.msra.mxu0 0
        %1644 = vmatprep.subr.bf16.mxu0 0
        %1645 = vmatpush1.bf16.msra.mxu0 0
        %1646 = vmatprep.subr.bf16.mxu0 0
        %1647 = vmatpush1.bf16.msra.mxu0 0
        %1648 = vmatprep.subr.bf16.mxu0 0
        %1649 = vmatpush1.bf16.msra.mxu0 0
        %1650 = vmatprep.subr.bf16.mxu0 0
        %1651 = vmatpush1.bf16.msra.mxu0 0
        %1652 = vmatprep.mubr.bf16.mxu0 0
        %1653 = vmatmul.mubr.bf16.gmra.mrb[0].mxu0 %v1614
        %v1654 = vpop.f32.mrb[0].mxu0
        %v1655 = vadd.f32 0.0, %v1654
        %v1656 = vpop.f32.mrb[0].mxu0
        %v1657 = vpop.f32.mrb[0].mxu0
        %v1658 = vpop.f32.mrb[0].mxu0
        %1659 = vdwg.mxu0
        %v1661 = vsel %vm1612, %v909, 0
        %v1664 = vsel %vm1616, %v1435, 0
        %1666 = vmatprep.subr.bf16.mxu0 0
        %1667 = vmatpush1.bf16.msra.mxu0 %v1664
        %1668 = vmatprep.subr.bf16.mxu0 0
        %1669 = vmatpush1.bf16.msra.mxu0 0
        %1670 = vmatprep.subr.bf16.mxu0 0
        %1671 = vmatpush1.bf16.msra.mxu0 0
        %1672 = vmatprep.subr.bf16.mxu0 0
        %1673 = vmatpush1.bf16.msra.mxu0 0
        %1674 = vmatprep.subr.bf16.mxu0 0
        %1675 = vmatpush1.bf16.msra.mxu0 0
        %1676 = vmatprep.subr.bf16.mxu0 0
        %1677 = vmatpush1.bf16.msra.mxu0 0
        %1678 = vmatprep.subr.bf16.mxu0 0
        %1679 = vmatpush1.bf16.msra.mxu0 0
        %1680 = vmatprep.subr.bf16.mxu0 0
        %1681 = vmatpush1.bf16.msra.mxu0 0
        %1682 = vmatprep.subr.bf16.mxu0 0
        %1683 = vmatpush1.bf16.msra.mxu0 0
        %1684 = vmatprep.subr.bf16.mxu0 0
        %1685 = vmatpush1.bf16.msra.mxu0 0
        %1686 = vmatprep.subr.bf16.mxu0 0
        %1687 = vmatpush1.bf16.msra.mxu0 0
        %1688 = vmatprep.subr.bf16.mxu0 0
        %1689 = vmatpush1.bf16.msra.mxu0 0
        %1690 = vmatprep.subr.bf16.mxu0 0
        %1691 = vmatpush1.bf16.msra.mxu0 0
        %1692 = vmatprep.subr.bf16.mxu0 0
        %1693 = vmatpush1.bf16.msra.mxu0 0
        %1694 = vmatprep.subr.bf16.mxu0 0
        %1695 = vmatpush1.bf16.msra.mxu0 0
        %1696 = vmatprep.subr.bf16.mxu0 0
        %1697 = vmatpush1.bf16.msra.mxu0 0
        %1698 = vmatprep.mubr.bf16.mxu0 0
        %1699 = vmatmul.mubr.bf16.gmra.mrb[0].mxu0 %v1661
        %v1700 = vpop.f32.mrb[0].mxu0
        %v1701 = vadd.f32 0.0, %v1700
        %v1702 = vpop.f32.mrb[0].mxu0
        %v1703 = vpop.f32.mrb[0].mxu0
        %v1704 = vpop.f32.mrb[0].mxu0
        %1705 = vdwg.mxu0
        %v1707 = vsel %vm1612, %v912, 0
        %v1710 = vsel %vm1616, %v1438, 0
        %1712 = vmatprep.subr.bf16.mxu0 0
        %1713 = vmatpush1.bf16.msra.mxu0 %v1710
        %1714 = vmatprep.subr.bf16.mxu0 0
        %1715 = vmatpush1.bf16.msra.mxu0 0
        %1716 = vmatprep.subr.bf16.mxu0 0
        %1717 = vmatpush1.bf16.msra.mxu0 0
        %1718 = vmatprep.subr.bf16.mxu0 0
        %1719 = vmatpush1.bf16.msra.mxu0 0
        %1720 = vmatprep.subr.bf16.mxu0 0
        %1721 = vmatpush1.bf16.msra.mxu0 0
        %1722 = vmatprep.subr.bf16.mxu0 0
        %1723 = vmatpush1.bf16.msra.mxu0 0
        %1724 = vmatprep.subr.bf16.mxu0 0
        %1725 = vmatpush1.bf16.msra.mxu0 0
        %1726 = vmatprep.subr.bf16.mxu0 0
        %1727 = vmatpush1.bf16.msra.mxu0 0
        %1728 = vmatprep.subr.bf16.mxu0 0
        %1729 = vmatpush1.bf16.msra.mxu0 0
        %1730 = vmatprep.subr.bf16.mxu0 0
        %1731 = vmatpush1.bf16.msra.mxu0 0
        %1732 = vmatprep.subr.bf16.mxu0 0
        %1733 = vmatpush1.bf16.msra.mxu0 0
        %1734 = vmatprep.subr.bf16.mxu0 0
        %1735 = vmatpush1.bf16.msra.mxu0 0
        %1736 = vmatprep.subr.bf16.mxu0 0
        %1737 = vmatpush1.bf16.msra.mxu0 0
        %1738 = vmatprep.subr.bf16.mxu0 0
        %1739 = vmatpush1.bf16.msra.mxu0 0
        %1740 = vmatprep.subr.bf16.mxu0 0
        %1741 = vmatpush1.bf16.msra.mxu0 0
        %1742 = vmatprep.subr.bf16.mxu0 0
        %1743 = vmatpush1.bf16.msra.mxu0 0
        %1744 = vmatprep.mubr.bf16.mxu0 0
        %1745 = vmatmul.mubr.bf16.gmra.mrb[0].mxu0 %v1707
        %v1746 = vpop.f32.mrb[0].mxu0
        %v1747 = vadd.f32 0.0, %v1746
        %v1748 = vpop.f32.mrb[0].mxu0
        %v1749 = vpop.f32.mrb[0].mxu0
        %v1750 = vpop.f32.mrb[0].mxu0
        %1751 = vdwg.mxu0
        %v1753 = vsel %vm1612, %v915, 0
        %v1756 = vsel %vm1616, %v1441, 0
        %1758 = vmatprep.subr.bf16.mxu0 0
        %1759 = vmatpush1.bf16.msra.mxu0 %v1756
        %1760 = vmatprep.subr.bf16.mxu0 0
        %1761 = vmatpush1.bf16.msra.mxu0 0
        %1762 = vmatprep.subr.bf16.mxu0 0
        %1763 = vmatpush1.bf16.msra.mxu0 0
        %1764 = vmatprep.subr.bf16.mxu0 0
        %1765 = vmatpush1.bf16.msra.mxu0 0
        %1766 = vmatprep.subr.bf16.mxu0 0
        %1767 = vmatpush1.bf16.msra.mxu0 0
        %1768 = vmatprep.subr.bf16.mxu0 0
        %1769 = vmatpush1.bf16.msra.mxu0 0
        %1770 = vmatprep.subr.bf16.mxu0 0
        %1771 = vmatpush1.bf16.msra.mxu0 0
        %1772 = vmatprep.subr.bf16.mxu0 0
        %1773 = vmatpush1.bf16.msra.mxu0 0
        %1774 = vmatprep.subr.bf16.mxu0 0
        %1775 = vmatpush1.bf16.msra.mxu0 0
        %1776 = vmatprep.subr.bf16.mxu0 0
        %1777 = vmatpush1.bf16.msra.mxu0 0
        %1778 = vmatprep.subr.bf16.mxu0 0
        %1779 = vmatpush1.bf16.msra.mxu0 0
        %1780 = vmatprep.subr.bf16.mxu0 0
        %1781 = vmatpush1.bf16.msra.mxu0 0
        %1782 = vmatprep.subr.bf16.mxu0 0
        %1783 = vmatpush1.bf16.msra.mxu0 0
        %1784 = vmatprep.subr.bf16.mxu0 0
        %1785 = vmatpush1.bf16.msra.mxu0 0
        %1786 = vmatprep.subr.bf16.mxu0 0
        %1787 = vmatpush1.bf16.msra.mxu0 0
        %1788 = vmatprep.subr.bf16.mxu0 0
        %1789 = vmatpush1.bf16.msra.mxu0 0
        %1790 = vmatprep.mubr.bf16.mxu0 0
        %1791 = vmatmul.mubr.bf16.gmra.mrb[0].mxu0 %v1753
        %v1792 = vpop.f32.mrb[0].mxu0
        %v1793 = vadd.f32 0.0, %v1792
        %v1794 = vpop.f32.mrb[0].mxu0
        %v1795 = vpop.f32.mrb[0].mxu0
        %v1796 = vpop.f32.mrb[0].mxu0
        %1797 = vdwg.mxu0
        %v1798 = vsel %vm1612, %v1655, -inf
        %1799 = vmax.xlane.f32.xlu0 %v1798
        %v1800 = vpop.xlane.xlu0 %1799
        %v1801 = vsel %vm1612, %v1701, -inf
        %1802 = vmax.xlane.f32.xlu0 %v1801
        %v1803 = vpop.xlane.xlu0 %1802
        %v1804 = vsel %vm1612, %v1747, -inf
        %1805 = vmax.xlane.f32.xlu0 %v1804
        %v1806 = vpop.xlane.xlu0 %1805
        %v1807 = vsel %vm1612, %v1793, -inf
        %1808 = vmax.xlane.f32.xlu0 %v1807
        %v1809 = vpop.xlane.xlu0 %1808
        %v1810 = vsub.f32 %v1655, %v1800
        %v1811 = vsub.f32 %v1701, %v1803
        %v1812 = vsub.f32 %v1747, %v1806
        %v1813 = vsub.f32 %v1793, %v1809
        %v1814 = vmul.f32 %v1810, 1.442695
        %v1815 = vpow.pop %v1814
        %v1816 = vmul.f32 %v1811, 1.442695
        %v1817 = vpow.pop %v1816
        %v1818 = vmul.f32 %v1812, 1.442695
        %v1819 = vpow.pop %v1818
        %v1820 = vmul.f32 %v1813, 1.442695
        %v1821 = vpow.pop %v1820
        %v1822 = vsel %vm1612, %v1815, 0.0
        %1823 = vadd.xlane.f32.xlu0 %v1822
        %v1824 = vpop.xlane.xlu0 %1823
        %v1825 = vsel %vm1612, %v1817, 0.0
        %1826 = vadd.xlane.f32.xlu0 %v1825
        %v1827 = vpop.xlane.xlu0 %1826
        %v1828 = vsel %vm1612, %v1819, 0.0
        %1829 = vadd.xlane.f32.xlu0 %v1828
        %v1830 = vpop.xlane.xlu0 %1829
        %v1831 = vsel %vm1612, %v1821, 0.0
        %1832 = vadd.xlane.f32.xlu0 %v1831
        %v1833 = vpop.xlane.xlu0 %1832
        %v1834 = vrcp.pop %v1824
        %v1835 = vrcp.pop %v1827
        %v1836 = vrcp.pop %v1830
        %v1837 = vrcp.pop %v1833
        %v1838 = vmul.f32 %v1815, %v1834
        %v1839 = vmul.f32 %v1817, %v1835
        %v1840 = vmul.f32 %v1819, %v1836
        %v1841 = vmul.f32 %v1821, %v1837
        %v1842 = vpack.c.bf16 %v1838, %v1838
        %v1843 = vpack.c.bf16 %v1839, %v1839
        %v1844 = vpack.c.bf16 %v1840, %v1840
        %v1845 = vpack.c.bf16 %v1841, %v1841
        %v1847 = vsel %vm1612, %v1842, 0
        %v1850 = vsel %vm1616, %v1602, 0
        %1852 = vmatprep.subr.bf16.mxu0 0
        %1853 = vmatpush1.bf16.msra.mxu0 %v1850
        %1854 = vmatprep.subr.bf16.mxu0 0
        %1855 = vmatpush1.bf16.msra.mxu0 0
        %1856 = vmatprep.subr.bf16.mxu0 0
        %1857 = vmatpush1.bf16.msra.mxu0 0
        %1858 = vmatprep.subr.bf16.mxu0 0
        %1859 = vmatpush1.bf16.msra.mxu0 0
        %1860 = vmatprep.subr.bf16.mxu0 0
        %1861 = vmatpush1.bf16.msra.mxu0 0
        %1862 = vmatprep.subr.bf16.mxu0 0
        %1863 = vmatpush1.bf16.msra.mxu0 0
        %1864 = vmatprep.subr.bf16.mxu0 0
        %1865 = vmatpush1.bf16.msra.mxu0 0
        %1866 = vmatprep.subr.bf16.mxu0 0
        %1867 = vmatpush1.bf16.msra.mxu0 0
        %1868 = vmatprep.subr.bf16.mxu0 0
        %1869 = vmatpush1.bf16.msra.mxu0 0
        %1870 = vmatprep.subr.bf16.mxu0 0
        %1871 = vmatpush1.bf16.msra.mxu0 0
        %1872 = vmatprep.subr.bf16.mxu0 0
        %1873 = vmatpush1.bf16.msra.mxu0 0
        %1874 = vmatprep.subr.bf16.mxu0 0
        %1875 = vmatpush1.bf16.msra.mxu0 0
        %1876 = vmatprep.subr.bf16.mxu0 0
        %1877 = vmatpush1.bf16.msra.mxu0 0
        %1878 = vmatprep.subr.bf16.mxu0 0
        %1879 = vmatpush1.bf16.msra.mxu0 0
        %1880 = vmatprep.subr.bf16.mxu0 0
        %1881 = vmatpush1.bf16.msra.mxu0 0
        %1882 = vmatprep.subr.bf16.mxu0 0
        %1883 = vmatpush1.bf16.msra.mxu0 0
        %1884 = vmatprep.mubr.bf16.mxu0 0
        %1885 = vmatmul.mubr.bf16.gmra.mrb[0].mxu0 %v1847
        %v1886 = vpop.f32.mrb[0].mxu0
        %v1887 = vadd.f32 0.0, %v1886
        %v1888 = vpop.f32.mrb[0].mxu0
        %v1889 = vpop.f32.mrb[0].mxu0
        %v1890 = vpop.f32.mrb[0].mxu0
        %1891 = vdwg.mxu0
        %v1893 = vsel %vm1612, %v1843, 0
        %v1896 = vsel %vm1616, %v1605, 0
        %1898 = vmatprep.subr.bf16.mxu0 0
        %1899 = vmatpush1.bf16.msra.mxu0 %v1896
        %1900 = vmatprep.subr.bf16.mxu0 0
        %1901 = vmatpush1.bf16.msra.mxu0 0
        %1902 = vmatprep.subr.bf16.mxu0 0
        %1903 = vmatpush1.bf16.msra.mxu0 0
        %1904 = vmatprep.subr.bf16.mxu0 0
        %1905 = vmatpush1.bf16.msra.mxu0 0
        %1906 = vmatprep.subr.bf16.mxu0 0
        %1907 = vmatpush1.bf16.msra.mxu0 0
        %1908 = vmatprep.subr.bf16.mxu0 0
        %1909 = vmatpush1.bf16.msra.mxu0 0
        %1910 = vmatprep.subr.bf16.mxu0 0
        %1911 = vmatpush1.bf16.msra.mxu0 0
        %1912 = vmatprep.subr.bf16.mxu0 0
        %1913 = vmatpush1.bf16.msra.mxu0 0
        %1914 = vmatprep.subr.bf16.mxu0 0
        %1915 = vmatpush1.bf16.msra.mxu0 0
        %1916 = vmatprep.subr.bf16.mxu0 0
        %1917 = vmatpush1.bf16.msra.mxu0 0
        %1918 = vmatprep.subr.bf16.mxu0 0
        %1919 = vmatpush1.bf16.msra.mxu0 0
        %1920 = vmatprep.subr.bf16.mxu0 0
        %1921 = vmatpush1.bf16.msra.mxu0 0
        %1922 = vmatprep.subr.bf16.mxu0 0
        %1923 = vmatpush1.bf16.msra.mxu0 0
        %1924 = vmatprep.subr.bf16.mxu0 0
        %1925 = vmatpush1.bf16.msra.mxu0 0
        %1926 = vmatprep.subr.bf16.mxu0 0
        %1927 = vmatpush1.bf16.msra.mxu0 0
        %1928 = vmatprep.subr.bf16.mxu0 0
        %1929 = vmatpush1.bf16.msra.mxu0 0
        %1930 = vmatprep.mubr.bf16.mxu0 0
        %1931 = vmatmul.mubr.bf16.gmra.mrb[0].mxu0 %v1893
        %v1932 = vpop.f32.mrb[0].mxu0
        %v1933 = vadd.f32 0.0, %v1932
        %v1934 = vpop.f32.mrb[0].mxu0
        %v1935 = vpop.f32.mrb[0].mxu0
        %v1936 = vpop.f32.mrb[0].mxu0
        %1937 = vdwg.mxu0
        %v1939 = vsel %vm1612, %v1844, 0
        %v1942 = vsel %vm1616, %v1608, 0
        %1944 = vmatprep.subr.bf16.mxu0 0
        %1945 = vmatpush1.bf16.msra.mxu0 %v1942
        %1946 = vmatprep.subr.bf16.mxu0 0
        %1947 = vmatpush1.bf16.msra.mxu0 0
        %1948 = vmatprep.subr.bf16.mxu0 0
        %1949 = vmatpush1.bf16.msra.mxu0 0
        %1950 = vmatprep.subr.bf16.mxu0 0
        %1951 = vmatpush1.bf16.msra.mxu0 0
        %1952 = vmatprep.subr.bf16.mxu0 0
        %1953 = vmatpush1.bf16.msra.mxu0 0
        %1954 = vmatprep.subr.bf16.mxu0 0
        %1955 = vmatpush1.bf16.msra.mxu0 0
        %1956 = vmatprep.subr.bf16.mxu0 0
        %1957 = vmatpush1.bf16.msra.mxu0 0
        %1958 = vmatprep.subr.bf16.mxu0 0
        %1959 = vmatpush1.bf16.msra.mxu0 0
        %1960 = vmatprep.subr.bf16.mxu0 0
        %1961 = vmatpush1.bf16.msra.mxu0 0
        %1962 = vmatprep.subr.bf16.mxu0 0
        %1963 = vmatpush1.bf16.msra.mxu0 0
        %1964 = vmatprep.subr.bf16.mxu0 0
        %1965 = vmatpush1.bf16.msra.mxu0 0
        %1966 = vmatprep.subr.bf16.mxu0 0
        %1967 = vmatpush1.bf16.msra.mxu0 0
        %1968 = vmatprep.subr.bf16.mxu0 0
        %1969 = vmatpush1.bf16.msra.mxu0 0
        %1970 = vmatprep.subr.bf16.mxu0 0
        %1971 = vmatpush1.bf16.msra.mxu0 0
        %1972 = vmatprep.subr.bf16.mxu0 0
        %1973 = vmatpush1.bf16.msra.mxu0 0
        %1974 = vmatprep.subr.bf16.mxu0 0
        %1975 = vmatpush1.bf16.msra.mxu0 0
        %1976 = vmatprep.mubr.bf16.mxu0 0
        %1977 = vmatmul.mubr.bf16.gmra.mrb[0].mxu0 %v1939
        %v1978 = vpop.f32.mrb[0].mxu0
        %v1979 = vadd.f32 0.0, %v1978
        %v1980 = vpop.f32.mrb[0].mxu0
        %v1981 = vpop.f32.mrb[0].mxu0
        %v1982 = vpop.f32.mrb[0].mxu0
        %1983 = vdwg.mxu0
        %v1985 = vsel %vm1612, %v1845, 0
        %v1988 = vsel %vm1616, %v1611, 0
        %1990 = vmatprep.subr.bf16.mxu0 0
        %1991 = vmatpush1.bf16.msra.mxu0 %v1988
        %1992 = vmatprep.subr.bf16.mxu0 0
        %1993 = vmatpush1.bf16.msra.mxu0 0
        %1994 = vmatprep.subr.bf16.mxu0 0
        %1995 = vmatpush1.bf16.msra.mxu0 0
        %1996 = vmatprep.subr.bf16.mxu0 0
        %1997 = vmatpush1.bf16.msra.mxu0 0
        %1998 = vmatprep.subr.bf16.mxu0 0
        %1999 = vmatpush1.bf16.msra.mxu0 0
        %2000 = vmatprep.subr.bf16.mxu0 0
        %2001 = vmatpush1.bf16.msra.mxu0 0
        %2002 = vmatprep.subr.bf16.mxu0 0
        %2003 = vmatpush1.bf16.msra.mxu0 0
        %2004 = vmatprep.subr.bf16.mxu0 0
        %2005 = vmatpush1.bf16.msra.mxu0 0
        %2006 = vmatprep.subr.bf16.mxu0 0
        %2007 = vmatpush1.bf16.msra.mxu0 0
        %2008 = vmatprep.subr.bf16.mxu0 0
        %2009 = vmatpush1.bf16.msra.mxu0 0
        %2010 = vmatprep.subr.bf16.mxu0 0
        %2011 = vmatpush1.bf16.msra.mxu0 0
        %2012 = vmatprep.subr.bf16.mxu0 0
        %2013 = vmatpush1.bf16.msra.mxu0 0
        %2014 = vmatprep.subr.bf16.mxu0 0
        %2015 = vmatpush1.bf16.msra.mxu0 0
        %2016 = vmatprep.subr.bf16.mxu0 0
        %2017 = vmatpush1.bf16.msra.mxu0 0
        %2018 = vmatprep.subr.bf16.mxu0 0
        %2019 = vmatpush1.bf16.msra.mxu0 0
        %2020 = vmatprep.subr.bf16.mxu0 0
        %2021 = vmatpush1.bf16.msra.mxu0 0
        %2022 = vmatprep.mubr.bf16.mxu0 0
        %2023 = vmatmul.mubr.bf16.gmra.mrb[0].mxu0 %v1985
        %v2024 = vpop.f32.mrb[0].mxu0
        %v2025 = vadd.f32 0.0, %v2024
        %v2026 = vpop.f32.mrb[0].mxu0
        %v2027 = vpop.f32.mrb[0].mxu0
        %v2028 = vpop.f32.mrb[0].mxu0
        %2029 = vdwg.mxu0
        %v2030 = vpack.c.bf16 %v1887, %v1887
        %v2032 = vunpack.c.l.s4 1983009808
        %v2033 = vunpack.c.0.s8 %v2032
        %v2034 = vlaneseq
        %v2035 = vshrl.u32 %v2034, 7
        %v2036 = vsub.s32 %v2033, %v2035
        %v2037 = vrot.slane %v2030, %v2036
        %v2038 = vpack.c.bf16 %v1979, %v1979
        %v2040 = vunpack.c.l.s4 1983009808
        %v2041 = vunpack.c.0.s8 %v2040
        %v2042 = vlaneseq
        %v2043 = vshrl.u32 %v2042, 7
        %v2044 = vsub.s32 %v2041, %v2043
        %v2045 = vrot.slane %v2038, %v2044
        %v2046 = vcombine.low %v2037, %v2045
        %v2047 = vcombine.high %v2037, %v2045
        %v2049 = vunpack.c.l.s4 1934713408
        %v2050 = vunpack.c.0.s8 %v2049
        %v2051 = vlaneseq
        %v2052 = vshrl.u32 %v2051, 7
        %v2053 = vsub.s32 %v2050, %v2052
        %v2054 = vrot.slane %v2046, %v2053
        %v2056 = vunpack.c.l.s4 1934713408
        %v2057 = vunpack.c.0.s8 %v2056
        %v2058 = vlaneseq
        %v2059 = vshrl.u32 %v2058, 7
        %v2060 = vsub.s32 %v2057, %v2059
        %v2061 = vrot.slane %v2047, %v2060
        %v2062 = vcombine.high %v2054, 0
        %v2063 = vcombine.high %v2061, 0
        %v2064 = vpack.c.bf16 %v1933, %v1933
        %v2066 = vunpack.c.l.s4 1983009808
        %v2067 = vunpack.c.0.s8 %v2066
        %v2068 = vlaneseq
        %v2069 = vshrl.u32 %v2068, 7
        %v2070 = vsub.s32 %v2067, %v2069
        %v2071 = vrot.slane %v2064, %v2070
        %v2072 = vpack.c.bf16 %v2025, %v2025
        %v2074 = vunpack.c.l.s4 1983009808
        %v2075 = vunpack.c.0.s8 %v2074
        %v2076 = vlaneseq
        %v2077 = vshrl.u32 %v2076, 7
        %v2078 = vsub.s32 %v2075, %v2077
        %v2079 = vrot.slane %v2072, %v2078
        %v2080 = vcombine.low %v2071, %v2079
        %v2081 = vcombine.high %v2071, %v2079
        %v2083 = vunpack.c.l.s4 1934713408
        %v2084 = vunpack.c.0.s8 %v2083
        %v2085 = vlaneseq
        %v2086 = vshrl.u32 %v2085, 7
        %v2087 = vsub.s32 %v2084, %v2086
        %v2088 = vrot.slane %v2080, %v2087
        %v2090 = vunpack.c.l.s4 1934713408
        %v2091 = vunpack.c.0.s8 %v2090
        %v2092 = vlaneseq
        %v2093 = vshrl.u32 %v2092, 7
        %v2094 = vsub.s32 %v2091, %v2093
        %v2095 = vrot.slane %v2081, %v2094
        %v2096 = vcombine.high %v2088, 0
        %v2097 = vcombine.high %v2095, 0
        %v2100 = vpack.i.b16 %v2088, %v2054
        %v2102 = vshrl.u32 %v2054, 16
        %v2103 = vshrl.u32 %v2088, 16
        %v2104 = vpack.i.b16 %v2103, %v2102
        %v2108 = vpack.i.b16 %v2096, %v2062
        %v2110 = vshrl.u32 %v2062, 16
        %v2111 = vshrl.u32 %v2096, 16
        %v2112 = vpack.i.b16 %v2111, %v2110
        %v2116 = vpack.i.b16 %v2095, %v2061
        %v2118 = vshrl.u32 %v2061, 16
        %v2119 = vshrl.u32 %v2095, 16
        %v2120 = vpack.i.b16 %v2119, %v2118
        %v2124 = vpack.i.b16 %v2097, %v2063
        %v2126 = vshrl.u32 %v2063, 16
        %v2127 = vshrl.u32 %v2097, 16
        %v2128 = vpack.i.b16 %v2127, %v2126
        %v2130 = vcombine.low %v2100, %v2116
        %v2132 = vunpack.c.l.s4 1983009808
        %v2133 = vunpack.c.0.s8 %v2132
        %v2134 = vlaneseq
        %v2135 = vshrl.u32 %v2134, 7
        %v2136 = vsub.s32 %v2133, %v2135
        %v2137 = vrot.slane %v2130, %v2136
        %v2138 = vcombine.low %v2108, %v2124
        %v2140 = vunpack.c.l.s4 1983009808
        %v2141 = vunpack.c.0.s8 %v2140
        %v2142 = vlaneseq
        %v2143 = vshrl.u32 %v2142, 7
        %v2144 = vsub.s32 %v2141, %v2143
        %v2145 = vrot.slane %v2138, %v2144
        %v2146 = vcombine.low %v2137, %v2145
        %v2148 = vunpack.c.l.s4 1934713408
        %v2149 = vunpack.c.0.s8 %v2148
        %v2150 = vlaneseq
        %v2151 = vshrl.u32 %v2150, 7
        %v2152 = vsub.s32 %v2149, %v2151
        %v2153 = vrot.slane %v2146, %v2152
        %v2154 = vcombine.high %v2153, 0
        %v2155 = vcombine.low %v2104, %v2120
        %v2157 = vunpack.c.l.s4 1983009808
        %v2158 = vunpack.c.0.s8 %v2157
        %v2159 = vlaneseq
        %v2160 = vshrl.u32 %v2159, 7
        %v2161 = vsub.s32 %v2158, %v2160
        %v2162 = vrot.slane %v2155, %v2161
        %v2163 = vcombine.low %v2112, %v2128
        %v2165 = vunpack.c.l.s4 1983009808
        %v2166 = vunpack.c.0.s8 %v2165
        %v2167 = vlaneseq
        %v2168 = vshrl.u32 %v2167, 7
        %v2169 = vsub.s32 %v2166, %v2168
        %v2170 = vrot.slane %v2163, %v2169
        %v2171 = vcombine.low %v2162, %v2170
        %v2173 = vunpack.c.l.s4 1934713408
        %v2174 = vunpack.c.0.s8 %v2173
        %v2175 = vlaneseq
        %v2176 = vshrl.u32 %v2175, 7
        %v2177 = vsub.s32 %v2174, %v2176
        %v2178 = vrot.slane %v2171, %v2177
        %v2179 = vcombine.high %v2178, 0
        %v2182 = vpack.i.b16 %v2178, %v2153
        %v2183 = vshrl.u32 %v2153, 16
        %v2184 = vshrl.u32 %v2178, 16
        %v2185 = vpack.i.b16 %v2184, %v2183
        %v2188 = vpack.i.b16 %v2179, %v2154
        %v2189 = vshrl.u32 %v2154, 16
        %v2190 = vshrl.u32 %v2179, 16
        %v2191 = vpack.i.b16 %v2190, %v2189
        %2192 = vrot.lane.b32.xlu0 %v2185, 8
        %v2193 = vpop.permute.xlu0 %2192
        %2194 = vrot.lane.b32.xlu0 %v2188, 16
        %v2195 = vpop.permute.xlu0 %2194
        %2196 = vrot.lane.b32.xlu0 %v2191, 24
        %v2197 = vpop.permute.xlu0 %2196
        %v2200 = vsel %vm1612, %v2182, %v2193
        %vm2201 = vcmask 130048
        %v2203 = vsel %vm2201, %v2200, %v2195
        %vm2204 = vcmask 195584
        %v2206 = vsel %vm2204, %v2203, %v2197
        %v2207 = vld [vmem:[%s614] sm:$0xf]
        %v2208 = vld [vmem:[%s614 + $0x4] sm:$0xf]
        %v2209 = vld [vmem:[%s614 + $0x8] sm:$0xf]
        %v2210 = vld [vmem:[%s614 + $0xc] sm:$0xf]
        %v2211 = vld [vmem:[%s617] sm:$0x1]
        %v2213 = vlaneseq
        %v2214 = vshrl.u32 %v2213, 7
        %v2215 = vsub.s32 0, %v2214
        %v2216 = vrot.slane %v2211, %v2215
        %v2222 = vunpack.c.l.b16 %v2207
        %v2223 = vunpack.c.l.b16 %v2208
        %v2224 = vunpack.c.l.b16 %v2209
        %v2225 = vunpack.c.l.b16 %v2210
        %v2226 = vpack.c.b16 %v2223, %v2222
        %v2227 = vpack.c.b16 %v2225, %v2224
        %v2230 = vsel %vm651, %v2206, 0
        %2232 = vmatprep.subr.bf16.mxu0 0
        %2233 = vmatpush1.bf16.msra.mxu0 %v2226
        %2234 = vmatprep.subr.bf16.mxu0 0
        %2235 = vmatpush1.bf16.msra.mxu0 %v2227
        %2236 = vmatprep.subr.bf16.mxu0 0
        %2237 = vmatpush1.bf16.msra.mxu0 0
        %2238 = vmatprep.subr.bf16.mxu0 0
        %2239 = vmatpush1.bf16.msra.mxu0 0
        %2240 = vmatprep.subr.bf16.mxu0 0
        %2241 = vmatpush1.bf16.msra.mxu0 0
        %2242 = vmatprep.subr.bf16.mxu0 0
        %2243 = vmatpush1.bf16.msra.mxu0 0
        %2244 = vmatprep.subr.bf16.mxu0 0
        %2245 = vmatpush1.bf16.msra.mxu0 0
        %2246 = vmatprep.subr.bf16.mxu0 0
        %2247 = vmatpush1.bf16.msra.mxu0 0
        %2248 = vmatprep.subr.bf16.mxu0 0
        %2249 = vmatpush1.bf16.msra.mxu0 0
        %2250 = vmatprep.subr.bf16.mxu0 0
        %2251 = vmatpush1.bf16.msra.mxu0 0
        %2252 = vmatprep.subr.bf16.mxu0 0
        %2253 = vmatpush1.bf16.msra.mxu0 0
        %2254 = vmatprep.subr.bf16.mxu0 0
        %2255 = vmatpush1.bf16.msra.mxu0 0
        %2256 = vmatprep.subr.bf16.mxu0 0
        %2257 = vmatpush1.bf16.msra.mxu0 0
        %2258 = vmatprep.subr.bf16.mxu0 0
        %2259 = vmatpush1.bf16.msra.mxu0 0
        %2260 = vmatprep.subr.bf16.mxu0 0
        %2261 = vmatpush1.bf16.msra.mxu0 0
        %2262 = vmatprep.subr.bf16.mxu0 0
        %2263 = vmatpush1.bf16.msra.mxu0 0
        %2264 = vmatprep.mubr.bf16.mxu0 0
        %2265 = vmatmul.mubr.bf16.gmra.mrb[0].mxu0 %v2230
        %v2266 = vpop.f32.mrb[0].mxu0
        %v2267 = vadd.f32 %v2216, %v2266
        %v2268 = vpop.f32.mrb[0].mxu0
        %v2269 = vpop.f32.mrb[0].mxu0
        %v2270 = vpop.f32.mrb[0].mxu0
        %2271 = vdwg.mxu0
        %v2272 = vadd.f32 %v648, %v2267
        %v2273 = vld [vmem:[%s620] sm:$0x1]
        %v2274 = vld [vmem:[%s623] sm:$0x1]
        %v2275 = vsel %vm651, %v2272, 0.0
        %2276 = vadd.xlane.f32.xlu0 %v2275
        %v2277 = vpop.xlane.xlu0 %2276
        %v2278 = vmul.f32 %v2277, %v655
        %v2279 = vsub.f32 %v2272, %v2278
        %v2280 = vmul.f32 %v2279, %v2279
        %v2281 = vsel %vm651, %v2280, 0.0
        %2282 = vadd.xlane.f32.xlu0 %v2281
        %v2283 = vpop.xlane.xlu0 %2282
        %v2284 = vmul.f32 %v2283, %v655
        %v2285 = vadd.f32 %v2284, 1e-05
        %v2286 = vrsqrt.pop %v2285
        %v2287 = vmul.f32 %v2279, %v2286
        %v2289 = vlaneseq
        %v2290 = vshrl.u32 %v2289, 7
        %v2291 = vsub.s32 0, %v2290
        %v2292 = vrot.slane %v2273, %v2291
        %v2294 = vmul.f32 %v2287, %v2292
        %v2296 = vlaneseq
        %v2297 = vshrl.u32 %v2296, 7
        %v2298 = vsub.s32 0, %v2297
        %v2299 = vrot.slane %v2274, %v2298
        %v2301 = vadd.f32 %v2294, %v2299
        %v2302 = vpack.c.bf16 %v2301, %v2301
        %v2303 = vld [vmem:[%s628] sm:$0xf]
        %v2304 = vld [vmem:[%s628 + $0x4] sm:$0xf]
        %v2305 = vld [vmem:[%s628 + $0x8] sm:$0xf]
        %v2306 = vld [vmem:[%s628 + $0xc] sm:$0xf]
        %v2307 = vld [vmem:[%s631] sm:$0x1]
        %v2309 = vlaneseq
        %v2310 = vshrl.u32 %v2309, 7
        %v2311 = vsub.s32 0, %v2310
        %v2312 = vrot.slane %v2307, %v2311
        %v2318 = vunpack.c.l.b16 %v2303
        %v2319 = vunpack.c.l.b16 %v2304
        %v2320 = vunpack.c.l.b16 %v2305
        %v2321 = vunpack.c.l.b16 %v2306
        %v2322 = vpack.c.b16 %v2319, %v2318
        %v2323 = vpack.c.b16 %v2321, %v2320
        %v2327 = vsel %vm651, %v2302, 0
        %2329 = vmatprep.subr.bf16.mxu0 0
        %2330 = vmatpush1.bf16.msra.mxu0 %v2322
        %2331 = vmatprep.subr.bf16.mxu0 0
        %2332 = vmatpush1.bf16.msra.mxu0 %v2323
        %2333 = vmatprep.subr.bf16.mxu0 0
        %2334 = vmatpush1.bf16.msra.mxu0 0
        %2335 = vmatprep.subr.bf16.mxu0 0
        %2336 = vmatpush1.bf16.msra.mxu0 0
        %2337 = vmatprep.subr.bf16.mxu0 0
        %2338 = vmatpush1.bf16.msra.mxu0 0
        %2339 = vmatprep.subr.bf16.mxu0 0
        %2340 = vmatpush1.bf16.msra.mxu0 0
        %2341 = vmatprep.subr.bf16.mxu0 0
        %2342 = vmatpush1.bf16.msra.mxu0 0
        %2343 = vmatprep.subr.bf16.mxu0 0
        %2344 = vmatpush1.bf16.msra.mxu0 0
        %2345 = vmatprep.subr.bf16.mxu0 0
        %2346 = vmatpush1.bf16.msra.mxu0 0
        %2347 = vmatprep.subr.bf16.mxu0 0
        %2348 = vmatpush1.bf16.msra.mxu0 0
        %2349 = vmatprep.subr.bf16.mxu0 0
        %2350 = vmatpush1.bf16.msra.mxu0 0
        %2351 = vmatprep.subr.bf16.mxu0 0
        %2352 = vmatpush1.bf16.msra.mxu0 0
        %2353 = vmatprep.subr.bf16.mxu0 0
        %2354 = vmatpush1.bf16.msra.mxu0 0
        %2355 = vmatprep.subr.bf16.mxu0 0
        %2356 = vmatpush1.bf16.msra.mxu0 0
        %2357 = vmatprep.subr.bf16.mxu0 0
        %2358 = vmatpush1.bf16.msra.mxu0 0
        %2359 = vmatprep.subr.bf16.mxu0 0
        %2360 = vmatpush1.bf16.msra.mxu0 0
        %2361 = vmatprep.mubr.bf16.mxu0 0
        %2362 = vmatmul.mubr.bf16.gmra.mrb[0].mxu0 %v2327
        %v2363 = vpop.f32.mrb[0].mxu0
        %v2364 = vadd.f32 %v2312, %v2363
        %v2365 = vpop.f32.mrb[0].mxu0
        %v2366 = vpop.f32.mrb[0].mxu0
        %v2367 = vpop.f32.mrb[0].mxu0
        %2368 = vdwg.mxu0
        %v2369 = vmul.f32 %v2364, 1.702
        %v2370 = vxor.u32 %v2369, 2147483648
        %v2371 = vmul.f32 %v2370, 1.442695
        %v2372 = vpow.pop %v2371
        %v2373 = vadd.f32 %v2372, 1.0
        %v2374 = vrcp.pop %v2373
        %v2375 = vmul.f32 1.0, %v2374
        %v2376 = vmul.f32 %v2364, %v2375
        %v2377 = vpack.c.bf16 %v2376, %v2376
        %v2378 = vld [vmem:[%s636] sm:$0xf]
        %v2379 = vld [vmem:[%s636 + $0x4] sm:$0xf]
        %v2380 = vld [vmem:[%s636 + $0x8] sm:$0xf]
        %v2381 = vld [vmem:[%s636 + $0xc] sm:$0xf]
        %v2382 = vld [vmem:[%s636 + $0x10] sm:$0xf]
        %v2383 = vld [vmem:[%s636 + $0x14] sm:$0xf]
        %v2384 = vld [vmem:[%s636 + $0x18] sm:$0xf]
        %v2385 = vld [vmem:[%s636 + $0x1c] sm:$0xf]
        %v2386 = vld [vmem:[%s636 + $0x20] sm:$0xf]
        %v2387 = vld [vmem:[%s636 + $0x24] sm:$0xf]
        %v2388 = vld [vmem:[%s636 + $0x28] sm:$0xf]
        %v2389 = vld [vmem:[%s636 + $0x2c] sm:$0xf]
        %v2390 = vld [vmem:[%s636 + $0x30] sm:$0xf]
        %v2391 = vld [vmem:[%s636 + $0x34] sm:$0xf]
        %v2392 = vld [vmem:[%s636 + $0x38] sm:$0xf]
        %v2393 = vld [vmem:[%s636 + $0x3c] sm:$0xf]
        %v2394 = vld [vmem:[%s639] sm:$0x1]
        %v2396 = vlaneseq
        %v2397 = vshrl.u32 %v2396, 7
        %v2398 = vsub.s32 0, %v2397
        %v2399 = vrot.slane %v2394, %v2398
        %v2417 = vunpack.c.l.b16 %v2378
        %v2418 = vunpack.c.l.b16 %v2379
        %v2419 = vunpack.c.l.b16 %v2380
        %v2420 = vunpack.c.l.b16 %v2381
        %v2421 = vunpack.c.l.b16 %v2382
        %v2422 = vunpack.c.l.b16 %v2383
        %v2423 = vunpack.c.l.b16 %v2384
        %v2424 = vunpack.c.l.b16 %v2385
        %v2425 = vunpack.c.l.b16 %v2386
        %v2426 = vunpack.c.l.b16 %v2387
        %v2427 = vunpack.c.l.b16 %v2388
        %v2428 = vunpack.c.l.b16 %v2389
        %v2429 = vunpack.c.l.b16 %v2390
        %v2430 = vunpack.c.l.b16 %v2391
        %v2431 = vunpack.c.l.b16 %v2392
        %v2432 = vunpack.c.l.b16 %v2393
        %v2433 = vpack.c.b16 %v2418, %v2417
        %v2434 = vpack.c.b16 %v2420, %v2419
        %v2435 = vpack.c.b16 %v2422, %v2421
        %v2436 = vpack.c.b16 %v2424, %v2423
        %v2437 = vpack.c.b16 %v2426, %v2425
        %v2438 = vpack.c.b16 %v2428, %v2427
        %v2439 = vpack.c.b16 %v2430, %v2429
        %v2440 = vpack.c.b16 %v2432, %v2431
        %2449 = vmatprep.subr.bf16.mxu0 0
        %2450 = vmatpush1.bf16.msra.mxu0 %v2433
        %2451 = vmatprep.subr.bf16.mxu0 0
        %2452 = vmatpush1.bf16.msra.mxu0 %v2434
        %2453 = vmatprep.subr.bf16.mxu0 0
        %2454 = vmatpush1.bf16.msra.mxu0 %v2435
        %2455 = vmatprep.subr.bf16.mxu0 0
        %2456 = vmatpush1.bf16.msra.mxu0 %v2436
        %2457 = vmatprep.subr.bf16.mxu0 0
        %2458 = vmatpush1.bf16.msra.mxu0 %v2437
        %2459 = vmatprep.subr.bf16.mxu0 0
        %2460 = vmatpush1.bf16.msra.mxu0 %v2438
        %2461 = vmatprep.subr.bf16.mxu0 0
        %2462 = vmatpush1.bf16.msra.mxu0 %v2439
        %2463 = vmatprep.subr.bf16.mxu0 0
        %2464 = vmatpush1.bf16.msra.mxu0 %v2440
        %2465 = vmatprep.subr.bf16.mxu0 0
        %2466 = vmatpush1.bf16.msra.mxu0 0
        %2467 = vmatprep.subr.bf16.mxu0 0
        %2468 = vmatpush1.bf16.msra.mxu0 0
        %2469 = vmatprep.subr.bf16.mxu0 0
        %2470 = vmatpush1.bf16.msra.mxu0 0
        %2471 = vmatprep.subr.bf16.mxu0 0
        %2472 = vmatpush1.bf16.msra.mxu0 0
        %2473 = vmatprep.subr.bf16.mxu0 0
        %2474 = vmatpush1.bf16.msra.mxu0 0
        %2475 = vmatprep.subr.bf16.mxu0 0
        %2476 = vmatpush1.bf16.msra.mxu0 0
        %2477 = vmatprep.subr.bf16.mxu0 0
        %2478 = vmatpush1.bf16.msra.mxu0 0
        %2479 = vmatprep.subr.bf16.mxu0 0
        %2480 = vmatpush1.bf16.msra.mxu0 0
        %2481 = vmatprep.mubr.bf16.mxu0 0
        %2482 = vmatmul.mubr.bf16.gmra.mrb[0].mxu0 %v2377
        %v2483 = vpop.f32.mrb[0].mxu0
        %v2484 = vadd.f32 %v2399, %v2483
        %v2485 = vpop.f32.mrb[0].mxu0
        %v2486 = vpop.f32.mrb[0].mxu0
        %v2487 = vpop.f32.mrb[0].mxu0
        %2488 = vdwg.mxu0
        %v2489 = vadd.f32 %v2272, %v2484
        %2490 = vst.msk [vmem:[%s591] sm:$0xff] %vm651, %v2489
        %s2491 = sand.u32 %s385, 1
        %s2492 = scalar_lea.sflag [#allocation3], %s2491
        %s2493 = sand.u32 %s385, 1
        %s2494 = smul.addr %s2493, 8
        %s2495 = scalar_lea.vmem [#allocation2], %s2494
        // Predicated region
        $region77: #{tpu_custom_call.1} parent=71 // pred_check
          %p2496 = pneg %p395
        $region78: #{tpu_custom_call.1} parent=71 // pred_check_branch
          %2498 = sbr.rel (%p2496) target = $region80
        $region79: #{tpu_custom_call.1} parent=71 // pred_region
          %s2500 = ssub.s32 128, 128
          %2501 = vsyncadd %s2492, %s2500
          %s2502 = smul.addr %s31, 128
          %s2503 = scalar_lea.hbm %s13, %s2502
          %s2505 = sshll.u32 %s2495, 4
          %s2506 = int_to_ptr.vmem [resolvable:$true] %s2505
          %2508 = dma.vmem_to_hbm [thread:$0]  %s2506, 128, %s2503, %s2492
        $region80: #{tpu_custom_call.1} parent=71 // pred_fallthru
          _
      $region72: #{tpu_custom_call.1} parent=5 // pred_fallthru
        _
      %p2509 = scmp.le.s32.totalorder 2, %s22
      // Predicated region
      $region81: #{tpu_custom_call.1} parent=5 // pred_check
        %p2510 = pneg %p2509
      $region82: #{tpu_custom_call.1} parent=5 // pred_check_branch
        %2512 = sbr.rel (%p2510) target = $region84
      $region83: #{tpu_custom_call.1} parent=5 // pred_region
        %s2513 = ssub.s32 %s22, 2
        // Predicated region
        $region85: #{tpu_custom_call.1} parent=83 // pred_check
          %p2514 = pneg %p401
        $region86: #{tpu_custom_call.1} parent=83 // pred_check_branch
          %2516 = sbr.rel (%p2514) target = $region88
        $region87: #{tpu_custom_call.1} parent=83 // pred_region
          %s2517 = sand.u32 %s386, 1
          %s2518 = scalar_lea.sflag [#allocation3], %s2517
          %s2519 = sand.u32 %s386, 1
          %s2520 = smul.addr %s2519, 8
          %s2521 = scalar_lea.vmem [#allocation2], %s2520
          %2522 = dma.done %s2518, 128
        $region88: #{tpu_custom_call.1} parent=83 // pred_fallthru
          _
      $region84: #{tpu_custom_call.1} parent=5 // pred_fallthru
        _
    $region6: #{tpu_custom_call.1} parent=1 // loop_footer
      %s26 = sadd.s32 1, %s22
    $region7: #{tpu_custom_call.1} parent=1 // loop_footer_branch
      %21 = sbr.rel target = $region3
    $region8: #{tpu_custom_call.1} parent=1 // loop_exit
      _
    %2523 = vsyncpa [#allocation3], 1
    %s2524 = scalar_lea.sflag [#allocation3], 1
    %2525 = vsyncpa %s2524, 1

</llo_original>
